<compile_context>
chip_gen: v6e
topology: v6e:2x2x1
jax: 0.10.0
libtpu: 0.0.40
codegen_flags: <defaults>
</compile_context>

<pallas_src>
import functools

import jax
import jax.numpy as jnp
from jax.experimental import pallas as pl
from jax.experimental.pallas import tpu as pltpu


def read_unit_kernel(mem_ref, ctrl_ref, know_ref,
                     wmT_ref, bm_ref, wc_ref, wa_ref,
                     out_ref,
                     m_sc, l_sc, acc_sc, weff_sc,
                     *, dim, s_valid, s_tile, mask_s):
    # Per grid step (b = batch block, s = knowledge-length tile):
    #   mem_ref/ctrl_ref : (TB, dim)        know_ref : (TB, TS, dim) channels-last
    #   wmT (dim,dim)=wm.T   bm (1,dim)   wc (dim,2*dim) fused   wa (1,dim)
    #   out_ref : (TB, dim)   scratch: m (TB,1), l (TB,1), acc (TB,dim), weff (TB,dim)
    si = pl.program_id(1)
    ns = pl.num_programs(1)

    # ---- per-batch-block preamble: runs once, on the first S tile ----------------
    @pl.when(si == 0)
    def _():
        # mem = Linear(memory[-1])  : one (TB,dim)x(dim,dim) MXU matmul
        mem = jnp.dot(mem_ref[...], wmT_ref[...],
                      preferred_element_type=jnp.float32) + bm_ref[...]
        # Fold of concat-Linear -> (*control) -> attn-Linear(dim->1):
        #   logits[b,s] = <know[b,s,:], mem*v1 + v2>  (+ const(b), cancels in softmax)
        u = ctrl_ref[...] * wa_ref[...]                                   # (TB, dim) VPU
        v12 = jnp.dot(u, wc_ref[...],
                      preferred_element_type=jnp.float32)                 # (TB, 2*dim) MXU
        weff_sc[...] = mem * v12[:, :dim] + v12[:, dim:]                  # (TB, dim)
        m_sc[...] = jnp.full(m_sc.shape, -jnp.inf, dtype=m_sc.dtype)
        l_sc[...] = jnp.zeros(l_sc.shape, dtype=l_sc.dtype)
        acc_sc[...] = jnp.zeros(acc_sc.shape, dtype=acc_sc.dtype)

    # ---- online-softmax update for this S tile (know is the only big stream) -----
    know = know_ref[...].astype(jnp.float32)                              # (TB, TS, dim)
    logits = jnp.sum(know * weff_sc[...][:, None, :], axis=-1)            # (TB, TS)

    if mask_s:  # S was padded up to a multiple of TS: padded rows must not attend.
        pos = si * s_tile + jax.lax.broadcasted_iota(jnp.int32, logits.shape, 1)
        logits = jnp.where(pos < s_valid, logits, -jnp.inf)

    m_prev = m_sc[...]
    m_new = jnp.maximum(m_prev, jnp.max(logits, axis=-1, keepdims=True))  # (TB, 1)
    alpha = jnp.exp(m_prev - m_new)
    e = jnp.exp(logits - m_new)                                           # (TB, TS)
    l_sc[...] = alpha * l_sc[...] + jnp.sum(e, axis=-1, keepdims=True)
    acc_sc[...] = alpha * acc_sc[...] + jnp.sum(e[:, :, None] * know, axis=1)
    m_sc[...] = m_new

    # ---- finalize: deferred softmax normalization on the (TB, dim) output --------
    @pl.when(si == ns - 1)
    def _():
        out_ref[...] = (acc_sc[...] *
                        pl.reciprocal(l_sc[...], approx=False)).astype(out_ref.dtype)


def _round_up(x, m):
    return ((x + m - 1) // m) * m


def _vmem_limit_bytes():
    try:
        cap = int(pltpu.get_tpu_info().vmem_capacity_bytes)
    except Exception:
        cap = 64 * 1024 * 1024          # conservative fallback (v7x per-TC VMEM)
    return int(cap * 0.85)


def _choose_tiles(B, S, dim, know_itemsize, vmem_limit):
    """Pick (block_b, block_s) from a VMEM budget — know is the dominant consumer."""
    budget = int(vmem_limit * 0.8)
    # single-buffered f32 weights: wm.T (dim,dim) + wc (dim,2dim) + bm + wa
    weight_bytes = (3 * dim * dim + 2 * dim) * 4
    avail = max(budget - weight_bytes, 1 << 20)

    def row_cost(ts):
        return (2 * ts * dim * know_itemsize     # know block, double-buffered
                + 2 * ts * dim * 4               # headroom for in-kernel f32 temporaries
                + (3 * 2 + 2) * dim * 4 + 8)     # mem/ctrl/out blocks + m/l/acc/weff scratch

    ts = min(_round_up(S, 8), 512)
    while ts > 8 and avail // row_cost(ts) < 8:
        ts = max(8, (ts // 2 // 8) * 8)

    tb = int(avail // row_cost(ts))
    tb = max(8, (tb // 8) * 8)
    tb = min(tb, 256, _round_up(B, 8))
    # Prefer >= 2 batch blocks when B allows it, so the "parallel" batch axis can be
    # sharded across the two v7x TensorCores instead of idling one of them.
    b8 = _round_up(B, 8)
    if b8 >= 16 and b8 // tb < 2:
        tb = max(8, _round_up((b8 + 1) // 2, 8))
    return tb, ts


def read_unit(memory_last, know_cl, control_last, params, *, tiles=None):
    """memory_last: [B, dim]; know_cl: [B, S, dim] (channels-last); control_last: [B, dim].

    `know_cl` may be float32 or bfloat16 (upcast to f32 inside the kernel); bf16
    halves HBM traffic of the dominant stream on this memory-bound kernel.
    """
    B, S, dim = know_cl.shape
    wm, bm, wc, bc, wa, ba = params
    # bc / ba only shift the attention logits by a per-batch constant -> softmax-invariant.
    del bc, ba

    vmem_limit = _vmem_limit_bytes()
    if tiles is None:
        tb, ts = _choose_tiles(B, S, dim, jnp.dtype(know_cl.dtype).itemsize, vmem_limit)
    else:
        tb, ts = tiles

    Bp = _round_up(B, tb)
    Sp = _round_up(S, ts)
    memory_last = memory_last.astype(jnp.float32)
    control_last = control_last.astype(jnp.float32)
    if Bp != B:
        memory_last = jnp.pad(memory_last, ((0, Bp - B), (0, 0)))
        control_last = jnp.pad(control_last, ((0, Bp - B), (0, 0)))
    if Bp != B or Sp != S:
        know_cl = jnp.pad(know_cl, ((0, Bp - B), (0, Sp - S), (0, 0)))

    # Weight prep (trace-time, outside the kernel): transpose / reshape once.
    wm_t = wm.T.astype(jnp.float32)                 # (dim, dim)
    wc_f = wc.astype(jnp.float32)                   # (dim, 2*dim), fused v1/v2 matmul
    bm2 = bm.reshape(1, dim).astype(jnp.float32)
    wa2 = wa.reshape(1, dim).astype(jnp.float32)

    kernel = functools.partial(read_unit_kernel, dim=dim, s_valid=S,
                               s_tile=ts, mask_s=(Sp != S))
    grid = (Bp // tb, Sp // ts)

    def _run(single_buffer_weights):
        def wspec(shape):
            idx = lambda b, s: (0, 0)               # constant across the whole grid
            if single_buffer_weights:
                return pl.BlockSpec(shape, idx, pipeline_mode=pl.Buffered(1))
            return pl.BlockSpec(shape, idx)

        return pl.pallas_call(
            kernel,
            out_shape=jax.ShapeDtypeStruct((Bp, dim), jnp.float32),
            grid_spec=pltpu.PrefetchScalarGridSpec(
                num_scalar_prefetch=0,
                grid=grid,
                in_specs=[
                    pl.BlockSpec((tb, dim), lambda b, s: (b, 0)),         # memory[-1]
                    pl.BlockSpec((tb, dim), lambda b, s: (b, 0)),         # control[-1]
                    pl.BlockSpec((tb, ts, dim), lambda b, s: (b, s, 0)),  # know (channels-last)
                    wspec((dim, dim)),          # wm.T
                    wspec((1, dim)),            # bm
                    wspec((dim, 2 * dim)),      # wc (fused)
                    wspec((1, dim)),            # wa
                ],
                out_specs=pl.BlockSpec((tb, dim), lambda b, s: (b, 0)),
                scratch_shapes=[
                    pltpu.VMEM((tb, 1), jnp.float32),     # running max m
                    pltpu.VMEM((tb, 1), jnp.float32),     # running denom l
                    pltpu.VMEM((tb, dim), jnp.float32),   # unnormalized read accumulator
                    pltpu.VMEM((tb, dim), jnp.float32),   # folded weight vector w_eff
                ],
            ),
            compiler_params=pltpu.CompilerParams(
                dimension_semantics=("parallel", "arbitrary"),
                vmem_limit_bytes=vmem_limit,
            ),
        )(memory_last, control_last, know_cl, wm_t, bm2, wc_f, wa2)

    try:
        out = _run(True)
    except Exception:
        # Older / stricter backends without single-buffered pipeline_mode support:
        # fall back to default double-buffered weight tiles.
        out = _run(False)
    return out[:B]


def xavier_uniform(key, shape):
    fan_out, fan_in = shape
    bound = jnp.sqrt(6.0 / (fan_in + fan_out))
    return jax.random.uniform(key, shape, jnp.float32, -bound, bound)


def init_params(key, dim):
    k1, k2, k3 = jax.random.split(key, 3)
    wm = xavier_uniform(k1, (dim, dim))        # mem: Linear(dim, dim)
    bm = jnp.zeros((dim,), jnp.float32)
    wc = xavier_uniform(k2, (dim, 2 * dim))    # concat: Linear(2*dim, dim)
    bc = jnp.zeros((dim,), jnp.float32)
    wa = xavier_uniform(k3, (1, dim))          # attn: Linear(dim, 1)
    ba = jnp.zeros((1,), jnp.float32)
    return (wm, bm, wc, bc, wa, ba)


def read_unit_ref(memory_last, know, control_last, params):
    """Pure-JAX reference mirroring the PyTorch code exactly (know is [B, dim, S])."""
    wm, bm, wc, bc, wa, ba = params
    mem = (memory_last @ wm.T + bm)[:, :, None]                 # [B, dim, 1]
    cat = jnp.concatenate([mem * know, know], axis=1)           # [B, 2*dim, S]
    concat = jnp.transpose(cat, (0, 2, 1)) @ wc.T + bc          # [B, S, dim]
    attn = concat * control_last[:, None, :]                    # [B, S, dim]
    attn = (attn @ wa.T + ba)[..., 0]                           # [B, S]
    attn = jax.nn.softmax(attn, axis=1)[:, None, :]             # [B, 1, S]
    return (attn * know).sum(axis=2)                            # [B, dim]


if __name__ == "__main__":
    key = jax.random.PRNGKey(0)
    kp, km, kk, kc, km2, kk2, kc2 = jax.random.split(key, 7)

    # --- test 1: small shapes, single S tile ------------------------------------
    B, dim, S = 2, 32, 16
    params = init_params(kp, dim)
    memory_last = jax.random.normal(km, (B, dim), jnp.float32)
    know = jax.random.normal(kk, (B, dim, S), jnp.float32)      # PyTorch layout [B, dim, S]
    control_last = jax.random.normal(kc, (B, dim), jnp.float32)
    know_cl = jnp.transpose(know, (0, 2, 1))                    # channels-last, done once

    read = jax.block_until_ready(read_unit(memory_last, know_cl, control_last, params))
    ref = read_unit_ref(memory_last, know, control_last, params)
    assert read.shape == (B, dim)
    err1 = jnp.max(jnp.abs(read - ref))
    assert jnp.allclose(read, ref, atol=1e-3, rtol=1e-3), f"max abs err {err1}"

    # --- test 2: non-multiple-of-8 S + forced tiny tiles -> exercises the online
    #     (flash-style) softmax across multiple S tiles, S-padding mask, batch pad.
    B2, S2 = 2, 20
    memory_last2 = jax.random.normal(km2, (B2, dim), jnp.float32)
    know2 = jax.random.normal(kk2, (B2, dim, S2), jnp.float32)
    control_last2 = jax.random.normal(kc2, (B2, dim), jnp.float32)
    know2_cl = jnp.transpose(know2, (0, 2, 1))

    read2 = jax.block_until_ready(
        read_unit(memory_last2, know2_cl, control_last2, params, tiles=(8, 8)))
    ref2 = read_unit_ref(memory_last2, know2, control_last2, params)
    err2 = jnp.max(jnp.abs(read2 - ref2))
    assert jnp.allclose(read2, ref2, atol=1e-3, rtol=1e-3), f"max abs err {err2}"

    print("KERNEL_OK")
</pallas_src>

<mosaic_0001>
module attributes {stable_mosaic.version = 11 : i64} {
  func.func @read_unit_kernel(%arg0: i32, %arg1: i32, %arg2: memref<8x32xf32, #tpu.memory_space<vmem>>, %arg3: memref<8x32xf32, #tpu.memory_space<vmem>>, %arg4: memref<8x16x32xf32, #tpu.memory_space<vmem>>, %arg5: memref<32x32xf32, #tpu.memory_space<vmem>>, %arg6: memref<1x32xf32, #tpu.memory_space<vmem>>, %arg7: memref<32x64xf32, #tpu.memory_space<vmem>>, %arg8: memref<1x32xf32, #tpu.memory_space<vmem>>, %arg9: memref<8x32xf32, #tpu.memory_space<vmem>>, %arg10: memref<8x1xf32, #tpu.memory_space<vmem>>, %arg11: memref<8x1xf32, #tpu.memory_space<vmem>>, %arg12: memref<8x32xf32, #tpu.memory_space<vmem>>, %arg13: memref<8x32xf32, #tpu.memory_space<vmem>>) attributes {dimension_semantics = [#tpu.dimension_semantics<parallel>, #tpu.dimension_semantics<arbitrary>], iteration_bounds = array<i64: 1, 1>, scalar_prefetch = 0 : i64, scratch_operands = 4 : i64, tpu.core_type = #tpu.core_type<tc>, window_params = [{transform_indices = @transform_0, window_bounds = array<i64: 8, 32>}, {transform_indices = @transform_1, window_bounds = array<i64: 8, 32>}, {transform_indices = @transform_2, window_bounds = array<i64: 8, 16, 32>}, {pipeline_mode = #tpu.pipeline_mode<synchronous>, transform_indices = @transform_3, window_bounds = array<i64: 32, 32>}, {pipeline_mode = #tpu.pipeline_mode<synchronous>, transform_indices = @transform_4, window_bounds = array<i64: 1, 32>}, {pipeline_mode = #tpu.pipeline_mode<synchronous>, transform_indices = @transform_5, window_bounds = array<i64: 32, 64>}, {pipeline_mode = #tpu.pipeline_mode<synchronous>, transform_indices = @transform_6, window_bounds = array<i64: 1, 32>}, {transform_indices = @transform_7, window_bounds = array<i64: 8, 32>}]} {
    %c0_i32 = arith.constant 0 : i32
    %0 = arith.cmpi eq, %arg1, %c0_i32 : i32
    %1 = arith.extui %0 : i1 to i32
    %c0_i32_0 = arith.constant 0 : i32
    %2 = arith.cmpi ne, %1, %c0_i32_0 : i32
    scf.if %2 {
      %c0_22 = arith.constant 0 : index
      %c0_23 = arith.constant 0 : index
      %37 = vector.load %arg2[%c0_22, %c0_23] : memref<8x32xf32, #tpu.memory_space<vmem>>, vector<8x32xf32>
      %c0_24 = arith.constant 0 : index
      %c0_25 = arith.constant 0 : index
      %38 = vector.load %arg5[%c0_24, %c0_25] : memref<32x32xf32, #tpu.memory_space<vmem>>, vector<32x32xf32>
      %cst_26 = arith.constant dense<0.000000e+00> : vector<8x32xf32>
      %39 = tpu.matmul %37, %38, %cst_26 {dimension_numbers = #tpu.dot_dimension_numbers<[1], [0], [0], [1], [0, 0, 1, 1], [], []>} : vector<8x32xf32>, vector<32x32xf32>, vector<8x32xf32> -> vector<8x32xf32>
      %c0_27 = arith.constant 0 : index
      %c0_28 = arith.constant 0 : index
      %40 = vector.load %arg6[%c0_27, %c0_28] : memref<1x32xf32, #tpu.memory_space<vmem>>, vector<1x32xf32>
      %41 = vector.broadcast %40 : vector<1x32xf32> to vector<8x32xf32>
      %42 = arith.addf %39, %41 : vector<8x32xf32>
      %c0_29 = arith.constant 0 : index
      %c0_30 = arith.constant 0 : index
      %43 = vector.load %arg3[%c0_29, %c0_30] : memref<8x32xf32, #tpu.memory_space<vmem>>, vector<8x32xf32>
      %c0_31 = arith.constant 0 : index
      %c0_32 = arith.constant 0 : index
      %44 = vector.load %arg8[%c0_31, %c0_32] : memref<1x32xf32, #tpu.memory_space<vmem>>, vector<1x32xf32>
      %45 = vector.broadcast %44 : vector<1x32xf32> to vector<8x32xf32>
      %46 = arith.mulf %43, %45 : vector<8x32xf32>
      %c0_33 = arith.constant 0 : index
      %c0_34 = arith.constant 0 : index
      %47 = vector.load %arg7[%c0_33, %c0_34] : memref<32x64xf32, #tpu.memory_space<vmem>>, vector<32x64xf32>
      %cst_35 = arith.constant dense<0.000000e+00> : vector<8x64xf32>
      %48 = tpu.matmul %46, %47, %cst_35 {dimension_numbers = #tpu.dot_dimension_numbers<[1], [0], [0], [1], [0, 0, 1, 1], [], []>} : vector<8x32xf32>, vector<32x64xf32>, vector<8x64xf32> -> vector<8x64xf32>
      %49 = vector.extract_strided_slice %48 {offsets = [0, 0], sizes = [8, 32], strides = [1, 1]} : vector<8x64xf32> to vector<8x32xf32>
      %50 = arith.mulf %42, %49 : vector<8x32xf32>
      %51 = vector.extract_strided_slice %48 {offsets = [0, 32], sizes = [8, 32], strides = [1, 1]} : vector<8x64xf32> to vector<8x32xf32>
      %52 = arith.addf %50, %51 : vector<8x32xf32>
      %c0_36 = arith.constant 0 : index
      %c0_37 = arith.constant 0 : index
      %53 = vector.load %arg13[%c0_36, %c0_37] : memref<8x32xf32, #tpu.memory_space<vmem>>, vector<8x32xf32>
      tpu.vector_store %arg13[%c0_36, %c0_37], %52 {strides = array<i32>} : memref<8x32xf32, #tpu.memory_space<vmem>>, vector<8x32xf32>,
      %cst_38 = arith.constant 0xFF800000 : f32
      %54 = vector.broadcast %cst_38 : f32 to vector<8x1xf32>
      %c0_39 = arith.constant 0 : index
      %c0_40 = arith.constant 0 : index
      %55 = vector.load %arg10[%c0_39, %c0_40] : memref<8x1xf32, #tpu.memory_space<vmem>>, vector<8x1xf32>
      tpu.vector_store %arg10[%c0_39, %c0_40], %54 {strides = array<i32>} : memref<8x1xf32, #tpu.memory_space<vmem>>, vector<8x1xf32>,
      %cst_41 = arith.constant 0.000000e+00 : f32
      %56 = vector.broadcast %cst_41 : f32 to vector<8x1xf32>
      %c0_42 = arith.constant 0 : index
      %c0_43 = arith.constant 0 : index
      %57 = vector.load %arg11[%c0_42, %c0_43] : memref<8x1xf32, #tpu.memory_space<vmem>>, vector<8x1xf32>
      tpu.vector_store %arg11[%c0_42, %c0_43], %56 {strides = array<i32>} : memref<8x1xf32, #tpu.memory_space<vmem>>, vector<8x1xf32>,
      %cst_44 = arith.constant 0.000000e+00 : f32
      %58 = vector.broadcast %cst_44 : f32 to vector<8x32xf32>
      %c0_45 = arith.constant 0 : index
      %c0_46 = arith.constant 0 : index
      %59 = vector.load %arg12[%c0_45, %c0_46] : memref<8x32xf32, #tpu.memory_space<vmem>>, vector<8x32xf32>
      tpu.vector_store %arg12[%c0_45, %c0_46], %58 {strides = array<i32>} : memref<8x32xf32, #tpu.memory_space<vmem>>, vector<8x32xf32>,
    } else {
    }
    %c0 = arith.constant 0 : index
    %c0_1 = arith.constant 0 : index
    %c0_2 = arith.constant 0 : index
    %3 = vector.load %arg4[%c0, %c0_1, %c0_2] : memref<8x16x32xf32, #tpu.memory_space<vmem>>, vector<8x16x32xf32>
    %c0_3 = arith.constant 0 : index
    %c0_4 = arith.constant 0 : index
    %4 = vector.load %arg13[%c0_3, %c0_4] : memref<8x32xf32, #tpu.memory_space<vmem>>, vector<8x32xf32>
    %5 = vector.shape_cast %4 : vector<8x32xf32> to vector<8x1x32xf32>
    %6 = vector.broadcast %5 : vector<8x1x32xf32> to vector<8x16x32xf32>
    %7 = arith.mulf %3, %6 : vector<8x16x32xf32>
    %cst = arith.constant dense<0.000000e+00> : vector<8x16xf32>
    %8 = vector.multi_reduction <add>, %7, %cst [2] : vector<8x16x32xf32> to vector<8x16xf32>
    %c0_5 = arith.constant 0 : index
    %c0_6 = arith.constant 0 : index
    %9 = vector.load %arg10[%c0_5, %c0_6] : memref<8x1xf32, #tpu.memory_space<vmem>>, vector<8x1xf32>
    %cst_7 = arith.constant dense<0xFF800000> : vector<8xf32>
    %10 = vector.multi_reduction <maximumf>, %8, %cst_7 [1] : vector<8x16xf32> to vector<8xf32>
    %11 = vector.shape_cast %10 : vector<8xf32> to vector<8x1xf32>
    %12 = arith.maximumf %9, %11 : vector<8x1xf32>
    %13 = arith.subf %9, %12 : vector<8x1xf32>
    %14 = math.exp %13 : vector<8x1xf32>
    %15 = vector.broadcast %12 : vector<8x1xf32> to vector<8x16xf32>
    %16 = arith.subf %8, %15 : vector<8x16xf32>
    %17 = math.exp %16 : vector<8x16xf32>
    %c0_8 = arith.constant 0 : index
    %c0_9 = arith.constant 0 : index
    %18 = vector.load %arg11[%c0_8, %c0_9] : memref<8x1xf32, #tpu.memory_space<vmem>>, vector<8x1xf32>
    %19 = arith.mulf %14, %18 : vector<8x1xf32>
    %cst_10 = arith.constant dense<0.000000e+00> : vector<8xf32>
    %20 = vector.multi_reduction <add>, %17, %cst_10 [1] : vector<8x16xf32> to vector<8xf32>
    %21 = vector.shape_cast %20 : vector<8xf32> to vector<8x1xf32>
    %22 = arith.addf %19, %21 : vector<8x1xf32>
    %c0_11 = arith.constant 0 : index
    %c0_12 = arith.constant 0 : index
    %23 = vector.load %arg11[%c0_11, %c0_12] : memref<8x1xf32, #tpu.memory_space<vmem>>, vector<8x1xf32>
    tpu.vector_store %arg11[%c0_11, %c0_12], %22 {strides = array<i32>} : memref<8x1xf32, #tpu.memory_space<vmem>>, vector<8x1xf32>,
    %c0_13 = arith.constant 0 : index
    %c0_14 = arith.constant 0 : index
    %24 = vector.load %arg12[%c0_13, %c0_14] : memref<8x32xf32, #tpu.memory_space<vmem>>, vector<8x32xf32>
    %25 = vector.broadcast %14 : vector<8x1xf32> to vector<8x32xf32>
    %26 = arith.mulf %25, %24 : vector<8x32xf32>
    %27 = vector.shape_cast %17 : vector<8x16xf32> to vector<8x16x1xf32>
    %28 = vector.broadcast %27 : vector<8x16x1xf32> to vector<8x16x32xf32>
    %29 = arith.mulf %28, %3 : vector<8x16x32xf32>
    %cst_15 = arith.constant dense<0.000000e+00> : vector<8x32xf32>
    %30 = vector.multi_reduction <add>, %29, %cst_15 [1] : vector<8x16x32xf32> to vector<8x32xf32>
    %31 = arith.addf %26, %30 : vector<8x32xf32>
    %c0_16 = arith.constant 0 : index
    %c0_17 = arith.constant 0 : index
    %32 = vector.load %arg12[%c0_16, %c0_17] : memref<8x32xf32, #tpu.memory_space<vmem>>, vector<8x32xf32>
    tpu.vector_store %arg12[%c0_16, %c0_17], %31 {strides = array<i32>} : memref<8x32xf32, #tpu.memory_space<vmem>>, vector<8x32xf32>,
    %c0_18 = arith.constant 0 : index
    %c0_19 = arith.constant 0 : index
    %33 = vector.load %arg10[%c0_18, %c0_19] : memref<8x1xf32, #tpu.memory_space<vmem>>, vector<8x1xf32>
    tpu.vector_store %arg10[%c0_18, %c0_19], %12 {strides = array<i32>} : memref<8x1xf32, #tpu.memory_space<vmem>>, vector<8x1xf32>,
    %c0_i32_20 = arith.constant 0 : i32
    %34 = arith.cmpi eq, %arg1, %c0_i32_20 : i32
    %35 = arith.extui %34 : i1 to i32
    %c0_i32_21 = arith.constant 0 : i32
    %36 = arith.cmpi ne, %35, %c0_i32_21 : i32
    scf.if %36 {
      %c0_22 = arith.constant 0 : index
      %c0_23 = arith.constant 0 : index
      %37 = vector.load %arg12[%c0_22, %c0_23] : memref<8x32xf32, #tpu.memory_space<vmem>>, vector<8x32xf32>
      %c0_24 = arith.constant 0 : index
      %c0_25 = arith.constant 0 : index
      %38 = vector.load %arg11[%c0_24, %c0_25] : memref<8x1xf32, #tpu.memory_space<vmem>>, vector<8x1xf32>
      %39 = tpu.reciprocal %38 : vector<8x1xf32> -> vector<8x1xf32>
      %40 = vector.broadcast %39 : vector<8x1xf32> to vector<8x32xf32>
      %41 = arith.mulf %37, %40 : vector<8x32xf32>
      %c0_26 = arith.constant 0 : index
      %c0_27 = arith.constant 0 : index
      %42 = vector.load %arg9[%c0_26, %c0_27] : memref<8x32xf32, #tpu.memory_space<vmem>>, vector<8x32xf32>
      tpu.vector_store %arg9[%c0_26, %c0_27], %41 {strides = array<i32>} : memref<8x32xf32, #tpu.memory_space<vmem>>, vector<8x32xf32>,
    } else {
    }
    return
  }
  func.func @transform_0(%arg0: i32, %arg1: i32) -> (i32, i32) {
    %c0_i32 = arith.constant 0 : i32
    %c0_i32_0 = arith.constant 0 : i32
    return %arg0, %c0_i32 : i32, i32
  }
  func.func @transform_1(%arg0: i32, %arg1: i32) -> (i32, i32) {
    %c0_i32 = arith.constant 0 : i32
    %c0_i32_0 = arith.constant 0 : i32
    return %arg0, %c0_i32 : i32, i32
  }
  func.func @transform_2(%arg0: i32, %arg1: i32) -> (i32, i32, i32) {
    %c0_i32 = arith.constant 0 : i32
    %c0_i32_0 = arith.constant 0 : i32
    return %arg0, %arg1, %c0_i32 : i32, i32, i32
  }
  func.func @transform_3(%arg0: i32, %arg1: i32) -> (i32, i32) {
    %c0_i32 = arith.constant 0 : i32
    %c0_i32_0 = arith.constant 0 : i32
    %c0_i32_1 = arith.constant 0 : i32
    return %c0_i32, %c0_i32_0 : i32, i32
  }
  func.func @transform_4(%arg0: i32, %arg1: i32) -> (i32, i32) {
    %c0_i32 = arith.constant 0 : i32
    %c0_i32_0 = arith.constant 0 : i32
    %c0_i32_1 = arith.constant 0 : i32
    return %c0_i32, %c0_i32_0 : i32, i32
  }
  func.func @transform_5(%arg0: i32, %arg1: i32) -> (i32, i32) {
    %c0_i32 = arith.constant 0 : i32
    %c0_i32_0 = arith.constant 0 : i32
    %c0_i32_1 = arith.constant 0 : i32
    return %c0_i32, %c0_i32_0 : i32, i32
  }
  func.func @transform_6(%arg0: i32, %arg1: i32) -> (i32, i32) {
    %c0_i32 = arith.constant 0 : i32
    %c0_i32_0 = arith.constant 0 : i32
    %c0_i32_1 = arith.constant 0 : i32
    return %c0_i32, %c0_i32_0 : i32, i32
  }
  func.func @transform_7(%arg0: i32, %arg1: i32) -> (i32, i32) {
    %c0_i32 = arith.constant 0 : i32
    %c0_i32_0 = arith.constant 0 : i32
    return %arg0, %c0_i32 : i32, i32
  }
}

module attributes {stable_mosaic.version = 11 : i64} {
  func.func @read_unit_kernel(%arg0: i32, %arg1: i32, %arg2: memref<8x32xf32, #tpu.memory_space<vmem>>, %arg3: memref<8x32xf32, #tpu.memory_space<vmem>>, %arg4: memref<8x16x32xf32, #tpu.memory_space<vmem>>, %arg5: memref<32x32xf32, #tpu.memory_space<vmem>>, %arg6: memref<1x32xf32, #tpu.memory_space<vmem>>, %arg7: memref<32x64xf32, #tpu.memory_space<vmem>>, %arg8: memref<1x32xf32, #tpu.memory_space<vmem>>, %arg9: memref<8x32xf32, #tpu.memory_space<vmem>>, %arg10: memref<8x1xf32, #tpu.memory_space<vmem>>, %arg11: memref<8x1xf32, #tpu.memory_space<vmem>>, %arg12: memref<8x32xf32, #tpu.memory_space<vmem>>, %arg13: memref<8x32xf32, #tpu.memory_space<vmem>>) attributes {dimension_semantics = [#tpu.dimension_semantics<parallel>, #tpu.dimension_semantics<arbitrary>], iteration_bounds = array<i64: 1, 1>, scalar_prefetch = 0 : i64, scratch_operands = 4 : i64, tpu.core_type = #tpu.core_type<tc>, window_params = [{transform_indices = @transform_0, window_bounds = array<i64: 8, 32>}, {transform_indices = @transform_1, window_bounds = array<i64: 8, 32>}, {transform_indices = @transform_2, window_bounds = array<i64: 8, 16, 32>}, {pipeline_mode = #tpu.pipeline_mode<synchronous>, transform_indices = @transform_3, window_bounds = array<i64: 32, 32>}, {pipeline_mode = #tpu.pipeline_mode<synchronous>, transform_indices = @transform_4, window_bounds = array<i64: 1, 32>}, {pipeline_mode = #tpu.pipeline_mode<synchronous>, transform_indices = @transform_5, window_bounds = array<i64: 32, 64>}, {pipeline_mode = #tpu.pipeline_mode<synchronous>, transform_indices = @transform_6, window_bounds = array<i64: 1, 32>}, {transform_indices = @transform_7, window_bounds = array<i64: 8, 32>}]} {
    %c0_i32 = arith.constant 0 : i32
    %0 = arith.cmpi eq, %arg1, %c0_i32 : i32
    %1 = arith.extui %0 : i1 to i32
    %c0_i32_0 = arith.constant 0 : i32
    %2 = arith.cmpi ne, %1, %c0_i32_0 : i32
    scf.if %2 {
      %c0_22 = arith.constant 0 : index
      %c0_23 = arith.constant 0 : index
      %37 = vector.load %arg2[%c0_22, %c0_23] : memref<8x32xf32, #tpu.memory_space<vmem>>, vector<8x32xf32>
      %c0_24 = arith.constant 0 : index
      %c0_25 = arith.constant 0 : index
      %38 = vector.load %arg5[%c0_24, %c0_25] : memref<32x32xf32, #tpu.memory_space<vmem>>, vector<32x32xf32>
      %cst_26 = arith.constant dense<0.000000e+00> : vector<8x32xf32>
      %39 = tpu.matmul %37, %38, %cst_26 {dimension_numbers = #tpu.dot_dimension_numbers<[1], [0], [0], [1], [0, 0, 1, 1], [], []>} : vector<8x32xf32>, vector<32x32xf32>, vector<8x32xf32> -> vector<8x32xf32>
      %c0_27 = arith.constant 0 : index
      %c0_28 = arith.constant 0 : index
      %40 = vector.load %arg6[%c0_27, %c0_28] : memref<1x32xf32, #tpu.memory_space<vmem>>, vector<1x32xf32>
      %41 = vector.broadcast %40 : vector<1x32xf32> to vector<8x32xf32>
      %42 = arith.addf %39, %41 : vector<8x32xf32>
      %c0_29 = arith.constant 0 : index
      %c0_30 = arith.constant 0 : index
      %43 = vector.load %arg3[%c0_29, %c0_30] : memref<8x32xf32, #tpu.memory_space<vmem>>, vector<8x32xf32>
      %c0_31 = arith.constant 0 : index
      %c0_32 = arith.constant 0 : index
      %44 = vector.load %arg8[%c0_31, %c0_32] : memref<1x32xf32, #tpu.memory_space<vmem>>, vector<1x32xf32>
      %45 = vector.broadcast %44 : vector<1x32xf32> to vector<8x32xf32>
      %46 = arith.mulf %43, %45 : vector<8x32xf32>
      %c0_33 = arith.constant 0 : index
      %c0_34 = arith.constant 0 : index
      %47 = vector.load %arg7[%c0_33, %c0_34] : memref<32x64xf32, #tpu.memory_space<vmem>>, vector<32x64xf32>
      %cst_35 = arith.constant dense<0.000000e+00> : vector<8x64xf32>
      %48 = tpu.matmul %46, %47, %cst_35 {dimension_numbers = #tpu.dot_dimension_numbers<[1], [0], [0], [1], [0, 0, 1, 1], [], []>} : vector<8x32xf32>, vector<32x64xf32>, vector<8x64xf32> -> vector<8x64xf32>
      %49 = vector.extract_strided_slice %48 {offsets = [0, 0], sizes = [8, 32], strides = [1, 1]} : vector<8x64xf32> to vector<8x32xf32>
      %50 = arith.mulf %42, %49 : vector<8x32xf32>
      %51 = vector.extract_strided_slice %48 {offsets = [0, 32], sizes = [8, 32], strides = [1, 1]} : vector<8x64xf32> to vector<8x32xf32>
      %52 = arith.addf %50, %51 : vector<8x32xf32>
      %c0_36 = arith.constant 0 : index
      %c0_37 = arith.constant 0 : index
      %53 = vector.load %arg13[%c0_36, %c0_37] : memref<8x32xf32, #tpu.memory_space<vmem>>, vector<8x32xf32>
      tpu.vector_store %arg13[%c0_36, %c0_37], %52 {strides = array<i32>} : memref<8x32xf32, #tpu.memory_space<vmem>>, vector<8x32xf32>,
      %cst_38 = arith.constant 0xFF800000 : f32
      %54 = vector.broadcast %cst_38 : f32 to vector<8x1xf32>
      %c0_39 = arith.constant 0 : index
      %c0_40 = arith.constant 0 : index
      %55 = vector.load %arg10[%c0_39, %c0_40] : memref<8x1xf32, #tpu.memory_space<vmem>>, vector<8x1xf32>
      tpu.vector_store %arg10[%c0_39, %c0_40], %54 {strides = array<i32>} : memref<8x1xf32, #tpu.memory_space<vmem>>, vector<8x1xf32>,
      %cst_41 = arith.constant 0.000000e+00 : f32
      %56 = vector.broadcast %cst_41 : f32 to vector<8x1xf32>
      %c0_42 = arith.constant 0 : index
      %c0_43 = arith.constant 0 : index
      %57 = vector.load %arg11[%c0_42, %c0_43] : memref<8x1xf32, #tpu.memory_space<vmem>>, vector<8x1xf32>
      tpu.vector_store %arg11[%c0_42, %c0_43], %56 {strides = array<i32>} : memref<8x1xf32, #tpu.memory_space<vmem>>, vector<8x1xf32>,
      %cst_44 = arith.constant 0.000000e+00 : f32
      %58 = vector.broadcast %cst_44 : f32 to vector<8x32xf32>
      %c0_45 = arith.constant 0 : index
      %c0_46 = arith.constant 0 : index
      %59 = vector.load %arg12[%c0_45, %c0_46] : memref<8x32xf32, #tpu.memory_space<vmem>>, vector<8x32xf32>
      tpu.vector_store %arg12[%c0_45, %c0_46], %58 {strides = array<i32>} : memref<8x32xf32, #tpu.memory_space<vmem>>, vector<8x32xf32>,
    } else {
    }
    %c0 = arith.constant 0 : index
    %c0_1 = arith.constant 0 : index
    %c0_2 = arith.constant 0 : index
    %3 = vector.load %arg4[%c0, %c0_1, %c0_2] : memref<8x16x32xf32, #tpu.memory_space<vmem>>, vector<8x16x32xf32>
    %c0_3 = arith.constant 0 : index
    %c0_4 = arith.constant 0 : index
    %4 = vector.load %arg13[%c0_3, %c0_4] : memref<8x32xf32, #tpu.memory_space<vmem>>, vector<8x32xf32>
    %5 = vector.shape_cast %4 : vector<8x32xf32> to vector<8x1x32xf32>
    %6 = vector.broadcast %5 : vector<8x1x32xf32> to vector<8x16x32xf32>
    %7 = arith.mulf %3, %6 : vector<8x16x32xf32>
    %cst = arith.constant dense<0.000000e+00> : vector<8x16xf32>
    %8 = vector.multi_reduction <add>, %7, %cst [2] : vector<8x16x32xf32> to vector<8x16xf32>
    %c0_5 = arith.constant 0 : index
    %c0_6 = arith.constant 0 : index
    %9 = vector.load %arg10[%c0_5, %c0_6] : memref<8x1xf32, #tpu.memory_space<vmem>>, vector<8x1xf32>
    %cst_7 = arith.constant dense<0xFF800000> : vector<8xf32>
    %10 = vector.multi_reduction <maximumf>, %8, %cst_7 [1] : vector<8x16xf32> to vector<8xf32>
    %11 = vector.shape_cast %10 : vector<8xf32> to vector<8x1xf32>
    %12 = arith.maximumf %9, %11 : vector<8x1xf32>
    %13 = arith.subf %9, %12 : vector<8x1xf32>
    %14 = math.exp %13 : vector<8x1xf32>
    %15 = vector.broadcast %12 : vector<8x1xf32> to vector<8x16xf32>
    %16 = arith.subf %8, %15 : vector<8x16xf32>
    %17 = math.exp %16 : vector<8x16xf32>
    %c0_8 = arith.constant 0 : index
    %c0_9 = arith.constant 0 : index
    %18 = vector.load %arg11[%c0_8, %c0_9] : memref<8x1xf32, #tpu.memory_space<vmem>>, vector<8x1xf32>
    %19 = arith.mulf %14, %18 : vector<8x1xf32>
    %cst_10 = arith.constant dense<0.000000e+00> : vector<8xf32>
    %20 = vector.multi_reduction <add>, %17, %cst_10 [1] : vector<8x16xf32> to vector<8xf32>
    %21 = vector.shape_cast %20 : vector<8xf32> to vector<8x1xf32>
    %22 = arith.addf %19, %21 : vector<8x1xf32>
    %c0_11 = arith.constant 0 : index
    %c0_12 = arith.constant 0 : index
    %23 = vector.load %arg11[%c0_11, %c0_12] : memref<8x1xf32, #tpu.memory_space<vmem>>, vector<8x1xf32>
    tpu.vector_store %arg11[%c0_11, %c0_12], %22 {strides = array<i32>} : memref<8x1xf32, #tpu.memory_space<vmem>>, vector<8x1xf32>,
    %c0_13 = arith.constant 0 : index
    %c0_14 = arith.constant 0 : index
    %24 = vector.load %arg12[%c0_13, %c0_14] : memref<8x32xf32, #tpu.memory_space<vmem>>, vector<8x32xf32>
    %25 = vector.broadcast %14 : vector<8x1xf32> to vector<8x32xf32>
    %26 = arith.mulf %25, %24 : vector<8x32xf32>
    %27 = vector.shape_cast %17 : vector<8x16xf32> to vector<8x16x1xf32>
    %28 = vector.broadcast %27 : vector<8x16x1xf32> to vector<8x16x32xf32>
    %29 = arith.mulf %28, %3 : vector<8x16x32xf32>
    %cst_15 = arith.constant dense<0.000000e+00> : vector<8x32xf32>
    %30 = vector.multi_reduction <add>, %29, %cst_15 [1] : vector<8x16x32xf32> to vector<8x32xf32>
    %31 = arith.addf %26, %30 : vector<8x32xf32>
    %c0_16 = arith.constant 0 : index
    %c0_17 = arith.constant 0 : index
    %32 = vector.load %arg12[%c0_16, %c0_17] : memref<8x32xf32, #tpu.memory_space<vmem>>, vector<8x32xf32>
    tpu.vector_store %arg12[%c0_16, %c0_17], %31 {strides = array<i32>} : memref<8x32xf32, #tpu.memory_space<vmem>>, vector<8x32xf32>,
    %c0_18 = arith.constant 0 : index
    %c0_19 = arith.constant 0 : index
    %33 = vector.load %arg10[%c0_18, %c0_19] : memref<8x1xf32, #tpu.memory_space<vmem>>, vector<8x1xf32>
    tpu.vector_store %arg10[%c0_18, %c0_19], %12 {strides = array<i32>} : memref<8x1xf32, #tpu.memory_space<vmem>>, vector<8x1xf32>,
    %c0_i32_20 = arith.constant 0 : i32
    %34 = arith.cmpi eq, %arg1, %c0_i32_20 : i32
    %35 = arith.extui %34 : i1 to i32
    %c0_i32_21 = arith.constant 0 : i32
    %36 = arith.cmpi ne, %35, %c0_i32_21 : i32
    scf.if %36 {
      %c0_22 = arith.constant 0 : index
      %c0_23 = arith.constant 0 : index
      %37 = vector.load %arg12[%c0_22, %c0_23] : memref<8x32xf32, #tpu.memory_space<vmem>>, vector<8x32xf32>
      %c0_24 = arith.constant 0 : index
      %c0_25 = arith.constant 0 : index
      %38 = vector.load %arg11[%c0_24, %c0_25] : memref<8x1xf32, #tpu.memory_space<vmem>>, vector<8x1xf32>
      %39 = tpu.reciprocal %38 : vector<8x1xf32> -> vector<8x1xf32>
      %40 = vector.broadcast %39 : vector<8x1xf32> to vector<8x32xf32>
      %41 = arith.mulf %37, %40 : vector<8x32xf32>
      %c0_26 = arith.constant 0 : index
      %c0_27 = arith.constant 0 : index
      %42 = vector.load %arg9[%c0_26, %c0_27] : memref<8x32xf32, #tpu.memory_space<vmem>>, vector<8x32xf32>
      tpu.vector_store %arg9[%c0_26, %c0_27], %41 {strides = array<i32>} : memref<8x32xf32, #tpu.memory_space<vmem>>, vector<8x32xf32>,
    } else {
    }
    return
  }
  func.func @transform_0(%arg0: i32, %arg1: i32) -> (i32, i32) {
    %c0_i32 = arith.constant 0 : i32
    %c0_i32_0 = arith.constant 0 : i32
    return %arg0, %c0_i32 : i32, i32
  }
  func.func @transform_1(%arg0: i32, %arg1: i32) -> (i32, i32) {
    %c0_i32 = arith.constant 0 : i32
    %c0_i32_0 = arith.constant 0 : i32
    return %arg0, %c0_i32 : i32, i32
  }
  func.func @transform_2(%arg0: i32, %arg1: i32) -> (i32, i32, i32) {
    %c0_i32 = arith.constant 0 : i32
    %c0_i32_0 = arith.constant 0 : i32
    return %arg0, %arg1, %c0_i32 : i32, i32, i32
  }
  func.func @transform_3(%arg0: i32, %arg1: i32) -> (i32, i32) {
    %c0_i32 = arith.constant 0 : i32
    %c0_i32_0 = arith.constant 0 : i32
    %c0_i32_1 = arith.constant 0 : i32
    return %c0_i32, %c0_i32_0 : i32, i32
  }
  func.func @transform_4(%arg0: i32, %arg1: i32) -> (i32, i32) {
    %c0_i32 = arith.constant 0 : i32
    %c0_i32_0 = arith.constant 0 : i32
    %c0_i32_1 = arith.constant 0 : i32
    return %c0_i32, %c0_i32_0 : i32, i32
  }
  func.func @transform_5(%arg0: i32, %arg1: i32) -> (i32, i32) {
    %c0_i32 = arith.constant 0 : i32
    %c0_i32_0 = arith.constant 0 : i32
    %c0_i32_1 = arith.constant 0 : i32
    return %c0_i32, %c0_i32_0 : i32, i32
  }
  func.func @transform_6(%arg0: i32, %arg1: i32) -> (i32, i32) {
    %c0_i32 = arith.constant 0 : i32
    %c0_i32_0 = arith.constant 0 : i32
    %c0_i32_1 = arith.constant 0 : i32
    return %c0_i32, %c0_i32_0 : i32, i32
  }
  func.func @transform_7(%arg0: i32, %arg1: i32) -> (i32, i32) {
    %c0_i32 = arith.constant 0 : i32
    %c0_i32_0 = arith.constant 0 : i32
    return %arg0, %c0_i32 : i32, i32
  }
}

</mosaic_0001>

<llo_original>
// kernel: tpu_custom_call.1
$region0: #{tpu_custom_call.1}
  #allocation0 [shape = 'u32[]', space=smem, size = 0x4, offset = 0x4, fixed_abs, tag = 'smem constant byte address 0x4 - core index']
  #allocation1 [shape = 'u32[144,128]{1,0:T(1,128)}', space=vmem, size = 0x12000, scoped, tag = 'internal scratch']
  #allocation2 [shape = 'f32[8,1]{1,0:T(8,128)}', space=vmem, size = 0x1000, scoped, tag = 'scratch operand']
  #allocation3 [shape = 'f32[8,1]{1,0:T(8,128)}', space=vmem, size = 0x1000, scoped, tag = 'scratch operand']
  #allocation4 [shape = 'f32[8,32]{1,0:T(8,128)}', space=vmem, size = 0x1000, scoped, tag = 'scratch operand']
  #allocation5 [shape = 'f32[8,32]{1,0:T(8,128)}', space=vmem, size = 0x1000, scoped, tag = 'scratch operand']
  %s0 = inlined_call_operand.hbm [shape: f32[8,32], index: 0, kind: input, shape index: {}]
  %s1 = inlined_call_operand.hbm [shape: f32[8,32], index: 1, kind: input, shape index: {}]
  %s2 = inlined_call_operand.hbm [shape: f32[8,16,32], index: 2, kind: input, shape index: {}]
  %s3 = inlined_call_operand.hbm [shape: f32[32,32], index: 3, kind: input, shape index: {}]
  %s4 = inlined_call_operand.vmem [shape: f32[1,32], index: 4, kind: input, shape index: {}]
  %s5 = inlined_call_operand.hbm [shape: f32[32,64], index: 5, kind: input, shape index: {}]
  %s6 = inlined_call_operand.vmem [shape: f32[1,32], index: 6, kind: input, shape index: {}]
  %s7 = inlined_call_operand.hbm [shape: f32[8,32], index: 7, kind: output, shape index: {}]
  %s8 = sld [smem:[#allocation0]]
  $region66: #{tpu_custom_call.1} parent=0
    _
  %s10 = ssub.s32 1, %s8
  %s11 = scalar_select 0, %s10, %s8
  $region1: #{tpu_custom_call.1} parent=0
    #allocation6 [shape = 'u8[4096]{0}', space=vmem, size = 0x1000, scoped, tag = 'input window, operand 0, single buffered']
    #allocation7 [shape = 's32[1]{0}', space=sflag, size = 0x4, scoped, tag = 'scoped memory for tpu_custom_call.1']
    #allocation8 [shape = 's32[1]{0}', space=sflag, size = 0x4, scoped, tag = 'scoped memory for tpu_custom_call.1']
    #allocation9 [shape = 'u8[4096]{0}', space=vmem, size = 0x1000, scoped, tag = 'input window, operand 1, single buffered']
    #allocation10 [shape = 's32[1]{0}', space=sflag, size = 0x4, scoped, tag = 'scoped memory for tpu_custom_call.1']
    #allocation11 [shape = 'u8[65536]{0}', space=vmem, size = 0x10000, scoped, tag = 'input window, operand 2, single buffered']
    #allocation12 [shape = 'u8[16384]{0}', space=vmem, size = 0x4000, scoped, tag = 'input window, operand 3, single buffered']
    #allocation13 [shape = 's32[1]{0}', space=sflag, size = 0x4, scoped, tag = 'scoped memory for tpu_custom_call.1']
    #allocation14 [shape = 'u8[16384]{0}', space=vmem, size = 0x4000, scoped, tag = 'input window, operand 5, single buffered']
    #allocation15 [shape = 'u8[4096]{0}', space=vmem, size = 0x1000, scoped, tag = 'output window, operand 0, single buffered']
    %12 = vsyncpa [#allocation7], 0
    %13 = vsyncpa [#allocation10], 0
    %14 = vsyncpa [#allocation13], 0
    %15 = vsyncpa [#allocation8], 0
    // Predicated region
    $region2: #{tpu_custom_call.1} parent=1 // pred_check
      _
    $region3: #{tpu_custom_call.1} parent=1 // pred_check_branch
      %17 = sbr.rel (0) target = $region5
    $region4: #{tpu_custom_call.1} parent=1 // pred_region
      %s19 = ssub.s32 128, 128
      %20 = vsyncadd [#allocation7], %s19
      %s22 = sshll.u32 [#allocation6], 4
      %s23 = int_to_ptr.vmem [resolvable:$true] %s22
      %25 = dma.hbm_to_vmem [thread:$0]  %s0, 128, %s23, [#allocation7]
    $region5: #{tpu_custom_call.1} parent=1 // pred_fallthru
      _
    // Predicated region
    $region6: #{tpu_custom_call.1} parent=1 // pred_check
      _
    $region7: #{tpu_custom_call.1} parent=1 // pred_check_branch
      %27 = sbr.rel (0) target = $region9
    $region8: #{tpu_custom_call.1} parent=1 // pred_region
      %s29 = ssub.s32 128, 128
      %30 = vsyncadd [#allocation10], %s29
      %s32 = sshll.u32 [#allocation9], 4
      %s33 = int_to_ptr.vmem [resolvable:$true] %s32
      %35 = dma.hbm_to_vmem [thread:$0]  %s1, 128, %s33, [#allocation10]
    $region9: #{tpu_custom_call.1} parent=1 // pred_fallthru
      _
    // Predicated region
    $region10: #{tpu_custom_call.1} parent=1 // pred_check
      _
    $region11: #{tpu_custom_call.1} parent=1 // pred_check_branch
      %37 = sbr.rel (0) target = $region13
    $region12: #{tpu_custom_call.1} parent=1 // pred_region
      %s39 = ssub.s32 2048, 2048
      %40 = vsyncadd [#allocation10], %s39
      %s41 = sshll.u32 [#allocation11], 4
      %s42 = int_to_ptr.vmem [resolvable:$true] %s41
      %47 = dma.hbm_to_vmem [thread:$0]  %s2, 2048, %s42, [#allocation10], 128, 128, 8
    $region13: #{tpu_custom_call.1} parent=1 // pred_fallthru
      _
    // Predicated region
    $region14: #{tpu_custom_call.1} parent=1 // pred_check
      _
    $region15: #{tpu_custom_call.1} parent=1 // pred_check_branch
      %49 = sbr.rel (0) target = $region17
    $region16: #{tpu_custom_call.1} parent=1 // pred_region
      %s51 = ssub.s32 512, 512
      %52 = vsyncadd [#allocation13], %s51
      %s53 = sshll.u32 [#allocation12], 4
      %s54 = int_to_ptr.vmem [resolvable:$true] %s53
      %59 = dma.hbm_to_vmem [thread:$0]  %s3, 512, %s54, [#allocation13], 128, 128, 8
    $region17: #{tpu_custom_call.1} parent=1 // pred_fallthru
      _
    // Predicated region
    $region18: #{tpu_custom_call.1} parent=1 // pred_check
      _
    $region19: #{tpu_custom_call.1} parent=1 // pred_check_branch
      %61 = sbr.rel (0) target = $region21
    $region20: #{tpu_custom_call.1} parent=1 // pred_region
      _
    $region21: #{tpu_custom_call.1} parent=1 // pred_fallthru
      _
    // Predicated region
    $region22: #{tpu_custom_call.1} parent=1 // pred_check
      _
    $region23: #{tpu_custom_call.1} parent=1 // pred_check_branch
      %63 = sbr.rel (0) target = $region25
    $region24: #{tpu_custom_call.1} parent=1 // pred_region
      %s65 = ssub.s32 512, 512
      %66 = vsyncadd [#allocation13], %s65
      %s67 = sshll.u32 [#allocation14], 4
      %s68 = int_to_ptr.vmem [resolvable:$true] %s67
      %73 = dma.hbm_to_vmem [thread:$0]  %s5, 512, %s68, [#allocation13], 128, 128, 8
    $region25: #{tpu_custom_call.1} parent=1 // pred_fallthru
      _
    // Predicated region
    $region26: #{tpu_custom_call.1} parent=1 // pred_check
      _
    $region27: #{tpu_custom_call.1} parent=1 // pred_check_branch
      %75 = sbr.rel (0) target = $region29
    $region28: #{tpu_custom_call.1} parent=1 // pred_region
      _
    $region29: #{tpu_custom_call.1} parent=1 // pred_fallthru
      _
    // Predicated region
    $region30: #{tpu_custom_call.1} parent=1 // pred_check
      _
    $region31: #{tpu_custom_call.1} parent=1 // pred_check_branch
      %77 = sbr.rel (0) target = $region33
    $region32: #{tpu_custom_call.1} parent=1 // pred_region
      %78 = dma.done [#allocation7], 128
    $region33: #{tpu_custom_call.1} parent=1 // pred_fallthru
      _
    // Predicated region
    $region34: #{tpu_custom_call.1} parent=1 // pred_check
      _
    $region35: #{tpu_custom_call.1} parent=1 // pred_check_branch
      %80 = sbr.rel (0) target = $region37
    $region36: #{tpu_custom_call.1} parent=1 // pred_region
      %81 = dma.done [#allocation10], 128
    $region37: #{tpu_custom_call.1} parent=1 // pred_fallthru
      _
    // Predicated region
    $region38: #{tpu_custom_call.1} parent=1 // pred_check
      _
    $region39: #{tpu_custom_call.1} parent=1 // pred_check_branch
      %83 = sbr.rel (0) target = $region41
    $region40: #{tpu_custom_call.1} parent=1 // pred_region
      %84 = dma.done [#allocation10], 2048
    $region41: #{tpu_custom_call.1} parent=1 // pred_fallthru
      _
    // Predicated region
    $region42: #{tpu_custom_call.1} parent=1 // pred_check
      _
    $region43: #{tpu_custom_call.1} parent=1 // pred_check_branch
      %86 = sbr.rel (0) target = $region45
    $region44: #{tpu_custom_call.1} parent=1 // pred_region
      %87 = dma.done [#allocation13], 512
    $region45: #{tpu_custom_call.1} parent=1 // pred_fallthru
      _
    // Predicated region
    $region46: #{tpu_custom_call.1} parent=1 // pred_check
      _
    $region47: #{tpu_custom_call.1} parent=1 // pred_check_branch
      %89 = sbr.rel (0) target = $region49
    $region48: #{tpu_custom_call.1} parent=1 // pred_region
      %90 = dma.done [#allocation13], 512
    $region49: #{tpu_custom_call.1} parent=1 // pred_fallthru
      _
    %p91 = scmp.eq.s32.totalorder 0, 0
    // Predicated region
    $region50: #{tpu_custom_call.1} parent=1 // pred_check
      %p92 = pneg %p91
    $region51: #{tpu_custom_call.1} parent=1 // pred_check_branch
      %94 = sbr.rel (%p92) target = $region53
    $region52: #{tpu_custom_call.1} parent=1 // pred_region
      %v95 = vld [vmem:[#allocation6] sm:$0xff]
      %v96 = vld [vmem:[#allocation12] sm:$0xff]
      %v97 = vld [vmem:[#allocation12 + $0x8] sm:$0xff]
      %v98 = vld [vmem:[#allocation12 + $0x10] sm:$0xff]
      %v99 = vld [vmem:[#allocation12 + $0x18] sm:$0xff]
      %v100 = vld [vmem:[%s4] sm:$0x1]
      %v102 = vlaneseq
      %v103 = vshrl.u32 %v102, 7
      %v104 = vsub.s32 0, %v103
      %v105 = vrot.slane %v100, %v104
      %vm107 = vcmask 261120
      %v109 = vsel %vm107, %v95, 0
      %111 = vmatprep.subr.mxu0 0.0
      %112 = vmatpush1.msra.mxu0 0.0
      %113 = vmatprep.subr.mxu0 0.0
      %114 = vmatpush1.msra.mxu0 0.0
      %115 = vmatprep.subr.mxu0 0.0
      %116 = vmatpush1.msra.mxu0 0.0
      %117 = vmatprep.subr.mxu0 0.0
      %118 = vmatpush1.msra.mxu0 0.0
      %119 = vmatprep.subr.mxu0 0.0
      %120 = vmatpush1.msra.mxu0 0.0
      %121 = vmatprep.subr.mxu0 0.0
      %122 = vmatpush1.msra.mxu0 0.0
      %123 = vmatprep.subr.mxu0 0.0
      %124 = vmatpush1.msra.mxu0 0.0
      %125 = vmatprep.subr.mxu0 0.0
      %126 = vmatpush1.msra.mxu0 0.0
      %127 = vmatprep.subr.mxu0 0.0
      %128 = vmatpush1.msra.mxu0 0.0
      %129 = vmatprep.subr.mxu0 0.0
      %130 = vmatpush1.msra.mxu0 0.0
      %131 = vmatprep.subr.mxu0 0.0
      %132 = vmatpush1.msra.mxu0 0.0
      %133 = vmatprep.subr.mxu0 0.0
      %134 = vmatpush1.msra.mxu0 0.0
      %135 = vmatprep.subr.mxu0 0.0
      %136 = vmatpush1.msra.mxu0 %v99
      %137 = vmatprep.subr.mxu0 0.0
      %138 = vmatpush1.msra.mxu0 %v98
      %139 = vmatprep.subr.mxu0 0.0
      %140 = vmatpush1.msra.mxu0 %v97
      %141 = vmatprep.subr.mxu0 0.0
      %142 = vmatpush1.msra.mxu0 %v96
      %143 = vmatprep.subr.mxu0 0.0
      %144 = vmatpush2.msra.mxu0 0.0
      %145 = vmatprep.subr.mxu0 0.0
      %146 = vmatpush2.msra.mxu0 0.0
      %147 = vmatprep.subr.mxu0 0.0
      %148 = vmatpush2.msra.mxu0 0.0
      %149 = vmatprep.subr.mxu0 0.0
      %150 = vmatpush2.msra.mxu0 0.0
      %151 = vmatprep.subr.mxu0 0.0
      %152 = vmatpush2.msra.mxu0 0.0
      %153 = vmatprep.subr.mxu0 0.0
      %154 = vmatpush2.msra.mxu0 0.0
      %155 = vmatprep.subr.mxu0 0.0
      %156 = vmatpush2.msra.mxu0 0.0
      %157 = vmatprep.subr.mxu0 0.0
      %158 = vmatpush2.msra.mxu0 0.0
      %159 = vmatprep.subr.mxu0 0.0
      %160 = vmatpush2.msra.mxu0 0.0
      %161 = vmatprep.subr.mxu0 0.0
      %162 = vmatpush2.msra.mxu0 0.0
      %163 = vmatprep.subr.mxu0 0.0
      %164 = vmatpush2.msra.mxu0 0.0
      %165 = vmatprep.subr.mxu0 0.0
      %166 = vmatpush2.msra.mxu0 0.0
      %167 = vmatprep.subr.mxu0 0.0
      %168 = vmatpush2.msra.mxu0 0.0
      %169 = vmatprep.subr.mxu0 0.0
      %170 = vmatpush2.msra.mxu0 0.0
      %171 = vmatprep.subr.mxu0 0.0
      %172 = vmatpush2.msra.mxu0 0.0
      %173 = vmatprep.subr.mxu0 0.0
      %174 = vmatpush2.msra.mxu0 0.0
      %175 = vmatprep.mubr.f32.mxu0 0.0
      %176 = vmatmul.mubr.f32.gmra.mxu0 %v109
      %v177 = vpop.f32.mrf.mxu0
      %v178 = vadd.f32 %v105, %v177
      %v179 = vpop.f32.mrf.mxu0
      %180 = vdwg.mxu0
      %v181 = vld [vmem:[#allocation9] sm:$0xff]
      %v182 = vld [vmem:[%s6] sm:$0x1]
      %v184 = vlaneseq
      %v185 = vshrl.u32 %v184, 7
      %v186 = vsub.s32 0, %v185
      %v187 = vrot.slane %v182, %v186
      %v189 = vmul.f32 %v181, %v187
      %v190 = vld [vmem:[#allocation14] sm:$0xff]
      %v191 = vld [vmem:[#allocation14 + $0x8] sm:$0xff]
      %v192 = vld [vmem:[#allocation14 + $0x10] sm:$0xff]
      %v193 = vld [vmem:[#allocation14 + $0x18] sm:$0xff]
      %v195 = vsel %vm107, %v189, 0
      %197 = vmatprep.subr.mxu0 0.0
      %198 = vmatpush1.msra.mxu0 0.0
      %199 = vmatprep.subr.mxu0 0.0
      %200 = vmatpush1.msra.mxu0 0.0
      %201 = vmatprep.subr.mxu0 0.0
      %202 = vmatpush1.msra.mxu0 0.0
      %203 = vmatprep.subr.mxu0 0.0
      %204 = vmatpush1.msra.mxu0 0.0
      %205 = vmatprep.subr.mxu0 0.0
      %206 = vmatpush1.msra.mxu0 0.0
      %207 = vmatprep.subr.mxu0 0.0
      %208 = vmatpush1.msra.mxu0 0.0
      %209 = vmatprep.subr.mxu0 0.0
      %210 = vmatpush1.msra.mxu0 0.0
      %211 = vmatprep.subr.mxu0 0.0
      %212 = vmatpush1.msra.mxu0 0.0
      %213 = vmatprep.subr.mxu0 0.0
      %214 = vmatpush1.msra.mxu0 0.0
      %215 = vmatprep.subr.mxu0 0.0
      %216 = vmatpush1.msra.mxu0 0.0
      %217 = vmatprep.subr.mxu0 0.0
      %218 = vmatpush1.msra.mxu0 0.0
      %219 = vmatprep.subr.mxu0 0.0
      %220 = vmatpush1.msra.mxu0 0.0
      %221 = vmatprep.subr.mxu0 0.0
      %222 = vmatpush1.msra.mxu0 %v193
      %223 = vmatprep.subr.mxu0 0.0
      %224 = vmatpush1.msra.mxu0 %v192
      %225 = vmatprep.subr.mxu0 0.0
      %226 = vmatpush1.msra.mxu0 %v191
      %227 = vmatprep.subr.mxu0 0.0
      %228 = vmatpush1.msra.mxu0 %v190
      %229 = vmatprep.subr.mxu0 0.0
      %230 = vmatpush2.msra.mxu0 0.0
      %231 = vmatprep.subr.mxu0 0.0
      %232 = vmatpush2.msra.mxu0 0.0
      %233 = vmatprep.subr.mxu0 0.0
      %234 = vmatpush2.msra.mxu0 0.0
      %235 = vmatprep.subr.mxu0 0.0
      %236 = vmatpush2.msra.mxu0 0.0
      %237 = vmatprep.subr.mxu0 0.0
      %238 = vmatpush2.msra.mxu0 0.0
      %239 = vmatprep.subr.mxu0 0.0
      %240 = vmatpush2.msra.mxu0 0.0
      %241 = vmatprep.subr.mxu0 0.0
      %242 = vmatpush2.msra.mxu0 0.0
      %243 = vmatprep.subr.mxu0 0.0
      %244 = vmatpush2.msra.mxu0 0.0
      %245 = vmatprep.subr.mxu0 0.0
      %246 = vmatpush2.msra.mxu0 0.0
      %247 = vmatprep.subr.mxu0 0.0
      %248 = vmatpush2.msra.mxu0 0.0
      %249 = vmatprep.subr.mxu0 0.0
      %250 = vmatpush2.msra.mxu0 0.0
      %251 = vmatprep.subr.mxu0 0.0
      %252 = vmatpush2.msra.mxu0 0.0
      %253 = vmatprep.subr.mxu0 0.0
      %254 = vmatpush2.msra.mxu0 0.0
      %255 = vmatprep.subr.mxu0 0.0
      %256 = vmatpush2.msra.mxu0 0.0
      %257 = vmatprep.subr.mxu0 0.0
      %258 = vmatpush2.msra.mxu0 0.0
      %259 = vmatprep.subr.mxu0 0.0
      %260 = vmatpush2.msra.mxu0 0.0
      %261 = vmatprep.mubr.f32.mxu0 0.0
      %262 = vmatmul.mubr.f32.gmra.mxu0 %v195
      %v263 = vpop.f32.mrf.mxu0
      %v264 = vadd.f32 0.0, %v263
      %v265 = vpop.f32.mrf.mxu0
      %266 = vdwg.mxu0
      %v267 = vmul.f32 %v178, %v264
      %269 = vrot.lane.b32.xlu0 %v264, 96
      %v270 = vpop.permute.xlu0 %269
      %v272 = vadd.f32 %v267, %v270
      %273 = vst.msk [vmem:[#allocation5] sm:$0xff] %vm107, %v272
      %vm274 = vcmask 7168
      %275 = vst.msk [vmem:[#allocation2] sm:$0xff] %vm274, -inf
      %276 = vst.msk [vmem:[#allocation3] sm:$0xff] %vm274, 0.0
      %277 = vst.msk [vmem:[#allocation4] sm:$0xff] %vm107, 0.0
    $region53: #{tpu_custom_call.1} parent=1 // pred_fallthru
      _
    %v278 = vld [vmem:[#allocation11] sm:$0xff]
    %v279 = vld [vmem:[#allocation11 + $0x8] sm:$0xff]
    %v280 = vld [vmem:[#allocation11 + $0x10] sm:$0xff]
    %v281 = vld [vmem:[#allocation11 + $0x18] sm:$0xff]
    %v282 = vld [vmem:[#allocation11 + $0x20] sm:$0xff]
    %v283 = vld [vmem:[#allocation11 + $0x28] sm:$0xff]
    %v284 = vld [vmem:[#allocation11 + $0x30] sm:$0xff]
    %v285 = vld [vmem:[#allocation11 + $0x38] sm:$0xff]
    %v286 = vld [vmem:[#allocation11 + $0x40] sm:$0xff]
    %v287 = vld [vmem:[#allocation11 + $0x48] sm:$0xff]
    %v288 = vld [vmem:[#allocation11 + $0x50] sm:$0xff]
    %v289 = vld [vmem:[#allocation11 + $0x58] sm:$0xff]
    %v290 = vld [vmem:[#allocation11 + $0x60] sm:$0xff]
    %v291 = vld [vmem:[#allocation11 + $0x68] sm:$0xff]
    %v292 = vld [vmem:[#allocation11 + $0x70] sm:$0xff]
    %v293 = vld [vmem:[#allocation11 + $0x78] sm:$0xff]
    %v294 = vld [vmem:[#allocation5] sm:$0xff]
    %v296 = vcombine.high %v294, %v294
    %v298 = vunpack.c.l.s4 1966171168
    %v299 = vunpack.c.0.s8 %v298
    %v300 = vlaneseq
    %v301 = vshrl.u32 %v300, 7
    %v302 = vsub.s32 %v299, %v301
    %v303 = vrot.slane %v294, %v302
    %v305 = vunpack.c.l.s4 1966171168
    %v306 = vunpack.c.0.s8 %v305
    %v307 = vlaneseq
    %v308 = vshrl.u32 %v307, 7
    %v309 = vsub.s32 %v306, %v308
    %v310 = vrot.slane %v296, %v309
    %v311 = vcombine.high %v303, %v303
    %v312 = vcombine.high %v310, %v310
    %v314 = vunpack.c.l.s4 1966171168
    %v315 = vunpack.c.0.s8 %v314
    %v316 = vlaneseq
    %v317 = vshrl.u32 %v316, 7
    %v318 = vsub.s32 %v315, %v317
    %v319 = vrot.slane %v303, %v318
    %v321 = vunpack.c.l.s4 1966171168
    %v322 = vunpack.c.0.s8 %v321
    %v323 = vlaneseq
    %v324 = vshrl.u32 %v323, 7
    %v325 = vsub.s32 %v322, %v324
    %v326 = vrot.slane %v310, %v325
    %v328 = vunpack.c.l.s4 1966171168
    %v329 = vunpack.c.0.s8 %v328
    %v330 = vlaneseq
    %v331 = vshrl.u32 %v330, 7
    %v332 = vsub.s32 %v329, %v331
    %v333 = vrot.slane %v311, %v332
    %v335 = vunpack.c.l.s4 1966171168
    %v336 = vunpack.c.0.s8 %v335
    %v337 = vlaneseq
    %v338 = vshrl.u32 %v337, 7
    %v339 = vsub.s32 %v336, %v338
    %v340 = vrot.slane %v312, %v339
    %v341 = vcombine.high %v319, %v319
    %v342 = vcombine.high %v326, %v326
    %v343 = vcombine.high %v333, %v333
    %v344 = vcombine.high %v340, %v340
    %v345 = vlaneseq
    %v346 = vshrl.u32 %v345, 7
    %v347 = vsub.s32 0, %v346
    %v348 = vrot.slane %v319, %v347
    %v349 = vlaneseq
    %v350 = vshrl.u32 %v349, 7
    %v351 = vsub.s32 0, %v350
    %v352 = vrot.slane %v333, %v351
    %v353 = vlaneseq
    %v354 = vshrl.u32 %v353, 7
    %v355 = vsub.s32 0, %v354
    %v356 = vrot.slane %v341, %v355
    %v357 = vlaneseq
    %v358 = vshrl.u32 %v357, 7
    %v359 = vsub.s32 0, %v358
    %v360 = vrot.slane %v343, %v359
    %v361 = vlaneseq
    %v362 = vshrl.u32 %v361, 7
    %v363 = vsub.s32 0, %v362
    %v364 = vrot.slane %v326, %v363
    %v365 = vlaneseq
    %v366 = vshrl.u32 %v365, 7
    %v367 = vsub.s32 0, %v366
    %v368 = vrot.slane %v340, %v367
    %v369 = vlaneseq
    %v370 = vshrl.u32 %v369, 7
    %v371 = vsub.s32 0, %v370
    %v372 = vrot.slane %v342, %v371
    %v373 = vlaneseq
    %v374 = vshrl.u32 %v373, 7
    %v375 = vsub.s32 0, %v374
    %v376 = vrot.slane %v344, %v375
    %v385 = vmul.f32 %v278, %v348
    %v386 = vmul.f32 %v279, %v348
    %v387 = vmul.f32 %v280, %v352
    %v388 = vmul.f32 %v281, %v352
    %v389 = vmul.f32 %v282, %v356
    %v390 = vmul.f32 %v283, %v356
    %v391 = vmul.f32 %v284, %v360
    %v392 = vmul.f32 %v285, %v360
    %v393 = vmul.f32 %v286, %v364
    %v394 = vmul.f32 %v287, %v364
    %v395 = vmul.f32 %v288, %v368
    %v396 = vmul.f32 %v289, %v368
    %v397 = vmul.f32 %v290, %v372
    %v398 = vmul.f32 %v291, %v372
    %v399 = vmul.f32 %v292, %v376
    %v400 = vmul.f32 %v293, %v376
    %vm401 = vcmask 261120
    %v402 = vsel %vm401, %v385, 0.0
    %403 = vadd.xlane.f32.xlu0 %v402
    %v404 = vpop.xlane.xlu0 %403
    %v405 = vsel %vm401, %v386, 0.0
    %406 = vadd.xlane.f32.xlu0 %v405
    %v407 = vpop.xlane.xlu0 %406
    %v408 = vsel %vm401, %v387, 0.0
    %409 = vadd.xlane.f32.xlu0 %v408
    %v410 = vpop.xlane.xlu0 %409
    %v411 = vsel %vm401, %v388, 0.0
    %412 = vadd.xlane.f32.xlu0 %v411
    %v413 = vpop.xlane.xlu0 %412
    %v414 = vsel %vm401, %v389, 0.0
    %415 = vadd.xlane.f32.xlu0 %v414
    %v416 = vpop.xlane.xlu0 %415
    %v417 = vsel %vm401, %v390, 0.0
    %418 = vadd.xlane.f32.xlu0 %v417
    %v419 = vpop.xlane.xlu0 %418
    %v420 = vsel %vm401, %v391, 0.0
    %421 = vadd.xlane.f32.xlu0 %v420
    %v422 = vpop.xlane.xlu0 %421
    %v423 = vsel %vm401, %v392, 0.0
    %424 = vadd.xlane.f32.xlu0 %v423
    %v425 = vpop.xlane.xlu0 %424
    %v426 = vsel %vm401, %v393, 0.0
    %427 = vadd.xlane.f32.xlu0 %v426
    %v428 = vpop.xlane.xlu0 %427
    %v429 = vsel %vm401, %v394, 0.0
    %430 = vadd.xlane.f32.xlu0 %v429
    %v431 = vpop.xlane.xlu0 %430
    %v432 = vsel %vm401, %v395, 0.0
    %433 = vadd.xlane.f32.xlu0 %v432
    %v434 = vpop.xlane.xlu0 %433
    %v435 = vsel %vm401, %v396, 0.0
    %436 = vadd.xlane.f32.xlu0 %v435
    %v437 = vpop.xlane.xlu0 %436
    %v438 = vsel %vm401, %v397, 0.0
    %439 = vadd.xlane.f32.xlu0 %v438
    %v440 = vpop.xlane.xlu0 %439
    %v441 = vsel %vm401, %v398, 0.0
    %442 = vadd.xlane.f32.xlu0 %v441
    %v443 = vpop.xlane.xlu0 %442
    %v444 = vsel %vm401, %v399, 0.0
    %445 = vadd.xlane.f32.xlu0 %v444
    %v446 = vpop.xlane.xlu0 %445
    %v447 = vsel %vm401, %v400, 0.0
    %448 = vadd.xlane.f32.xlu0 %v447
    %v449 = vpop.xlane.xlu0 %448
    %v450 = vld [vmem:[#allocation2] sm:$0xff]
    %v467 = vlaneseq
    %v468 = vand.u32 %v467, 127
    %v469 = vlaneseq
    %v470 = vshrl.u32 %v469, 7
    %v471 = vsub.s32 %v468, %v470
    %v472 = vrot.slane %v404, %v471
    %v473 = vadd.s32 %v468, 4294967288
    %v474 = vlaneseq
    %v475 = vshrl.u32 %v474, 7
    %v476 = vsub.s32 %v473, %v475
    %v477 = vrot.slane %v407, %v476
    %vm478 = vcmask 130112
    %v479 = vsel %vm478, %v477, %v472
    %v480 = vlaneseq
    %v481 = vshrl.u32 %v480, 7
    %v482 = vsub.s32 %v468, %v481
    %v483 = vrot.slane %v410, %v482
    %v484 = vlaneseq
    %v485 = vshrl.u32 %v484, 7
    %v486 = vsub.s32 %v473, %v485
    %v487 = vrot.slane %v413, %v486
    %v488 = vsel %vm478, %v487, %v483
    %v489 = vlaneseq
    %v490 = vshrl.u32 %v489, 7
    %v491 = vsub.s32 %v468, %v490
    %v492 = vrot.slane %v416, %v491
    %v493 = vlaneseq
    %v494 = vshrl.u32 %v493, 7
    %v495 = vsub.s32 %v473, %v494
    %v496 = vrot.slane %v419, %v495
    %v497 = vsel %vm478, %v496, %v492
    %v498 = vlaneseq
    %v499 = vshrl.u32 %v498, 7
    %v500 = vsub.s32 %v468, %v499
    %v501 = vrot.slane %v422, %v500
    %v502 = vlaneseq
    %v503 = vshrl.u32 %v502, 7
    %v504 = vsub.s32 %v473, %v503
    %v505 = vrot.slane %v425, %v504
    %v506 = vsel %vm478, %v505, %v501
    %v507 = vlaneseq
    %v508 = vshrl.u32 %v507, 7
    %v509 = vsub.s32 %v468, %v508
    %v510 = vrot.slane %v428, %v509
    %v511 = vlaneseq
    %v512 = vshrl.u32 %v511, 7
    %v513 = vsub.s32 %v473, %v512
    %v514 = vrot.slane %v431, %v513
    %v515 = vsel %vm478, %v514, %v510
    %v516 = vlaneseq
    %v517 = vshrl.u32 %v516, 7
    %v518 = vsub.s32 %v468, %v517
    %v519 = vrot.slane %v434, %v518
    %v520 = vlaneseq
    %v521 = vshrl.u32 %v520, 7
    %v522 = vsub.s32 %v473, %v521
    %v523 = vrot.slane %v437, %v522
    %v524 = vsel %vm478, %v523, %v519
    %v525 = vlaneseq
    %v526 = vshrl.u32 %v525, 7
    %v527 = vsub.s32 %v468, %v526
    %v528 = vrot.slane %v440, %v527
    %v529 = vlaneseq
    %v530 = vshrl.u32 %v529, 7
    %v531 = vsub.s32 %v473, %v530
    %v532 = vrot.slane %v443, %v531
    %v533 = vsel %vm478, %v532, %v528
    %v534 = vlaneseq
    %v535 = vshrl.u32 %v534, 7
    %v536 = vsub.s32 %v468, %v535
    %v537 = vrot.slane %v446, %v536
    %v538 = vlaneseq
    %v539 = vshrl.u32 %v538, 7
    %v540 = vsub.s32 %v473, %v539
    %v541 = vrot.slane %v449, %v540
    %v542 = vsel %vm478, %v541, %v537
    %vm543 = vcmask 1041409
    %v544 = vsel %vm543, %v488, %v479
    %vm545 = vcmask 1042434
    %v546 = vsel %vm545, %v497, %v544
    %vm547 = vcmask 1043459
    %v548 = vsel %vm547, %v506, %v546
    %vm549 = vcmask 1044484
    %v550 = vsel %vm549, %v515, %v548
    %vm551 = vcmask 1045509
    %v552 = vsel %vm551, %v524, %v550
    %vm553 = vcmask 1046534
    %v554 = vsel %vm553, %v533, %v552
    %vm555 = vcmask 1047559
    %v556 = vsel %vm555, %v542, %v554
    %vm558 = vcmask 130048
    %v559 = vsel %vm558, %v556, -inf
    %560 = vmax.xlane.f32.xlu0 %v559
    %v561 = vpop.xlane.xlu0 %560
    %v562 = vmax.f32 %v450, %v561
    %v563 = vsub.f32 %v450, %v562
    %v564 = vmul.f32 %v563, 1.442695
    %v565 = vpow.pop %v564
    %567 = vset.pattern.permute.xlu0 0
    %568 = vperm.xlu0 %567, %v562
    %v569 = vpop.permute.xlu0 %568
    %v570 = vlaneseq
    %v571 = vshrl.u32 %v570, 7
    %v572 = vsub.s32 0, %v571
    %v573 = vrot.slane %v569, %v572
    %v574 = vlaneseq
    %v575 = vshrl.u32 %v574, 7
    %v576 = vsub.s32 1, %v575
    %v577 = vrot.slane %v569, %v576
    %v578 = vlaneseq
    %v579 = vshrl.u32 %v578, 7
    %v580 = vsub.s32 2, %v579
    %v581 = vrot.slane %v569, %v580
    %v582 = vlaneseq
    %v583 = vshrl.u32 %v582, 7
    %v584 = vsub.s32 3, %v583
    %v585 = vrot.slane %v569, %v584
    %v586 = vlaneseq
    %v587 = vshrl.u32 %v586, 7
    %v588 = vsub.s32 4, %v587
    %v589 = vrot.slane %v569, %v588
    %v590 = vlaneseq
    %v591 = vshrl.u32 %v590, 7
    %v592 = vsub.s32 5, %v591
    %v593 = vrot.slane %v569, %v592
    %v594 = vlaneseq
    %v595 = vshrl.u32 %v594, 7
    %v596 = vsub.s32 6, %v595
    %v597 = vrot.slane %v569, %v596
    %v598 = vlaneseq
    %v599 = vshrl.u32 %v598, 7
    %v600 = vsub.s32 7, %v599
    %v601 = vrot.slane %v569, %v600
    %v610 = vsub.f32 %v404, %v573
    %v611 = vsub.f32 %v407, %v573
    %v612 = vsub.f32 %v410, %v577
    %v613 = vsub.f32 %v413, %v577
    %v614 = vsub.f32 %v416, %v581
    %v615 = vsub.f32 %v419, %v581
    %v616 = vsub.f32 %v422, %v585
    %v617 = vsub.f32 %v425, %v585
    %v618 = vsub.f32 %v428, %v589
    %v619 = vsub.f32 %v431, %v589
    %v620 = vsub.f32 %v434, %v593
    %v621 = vsub.f32 %v437, %v593
    %v622 = vsub.f32 %v440, %v597
    %v623 = vsub.f32 %v443, %v597
    %v624 = vsub.f32 %v446, %v601
    %v625 = vsub.f32 %v449, %v601
    %v626 = vmul.f32 %v610, 1.442695
    %v627 = vpow.pop %v626
    %v628 = vmul.f32 %v611, 1.442695
    %v629 = vpow.pop %v628
    %v630 = vmul.f32 %v612, 1.442695
    %v631 = vpow.pop %v630
    %v632 = vmul.f32 %v613, 1.442695
    %v633 = vpow.pop %v632
    %v634 = vmul.f32 %v614, 1.442695
    %v635 = vpow.pop %v634
    %v636 = vmul.f32 %v615, 1.442695
    %v637 = vpow.pop %v636
    %v638 = vmul.f32 %v616, 1.442695
    %v639 = vpow.pop %v638
    %v640 = vmul.f32 %v617, 1.442695
    %v641 = vpow.pop %v640
    %v642 = vmul.f32 %v618, 1.442695
    %v643 = vpow.pop %v642
    %v644 = vmul.f32 %v619, 1.442695
    %v645 = vpow.pop %v644
    %v646 = vmul.f32 %v620, 1.442695
    %v647 = vpow.pop %v646
    %v648 = vmul.f32 %v621, 1.442695
    %v649 = vpow.pop %v648
    %v650 = vmul.f32 %v622, 1.442695
    %v651 = vpow.pop %v650
    %v652 = vmul.f32 %v623, 1.442695
    %v653 = vpow.pop %v652
    %v654 = vmul.f32 %v624, 1.442695
    %v655 = vpow.pop %v654
    %v656 = vmul.f32 %v625, 1.442695
    %v657 = vpow.pop %v656
    %v658 = vld [vmem:[#allocation3] sm:$0xff]
    %v659 = vmul.f32 %v565, %v658
    %676 = vset.pattern.permute.xlu0 0
    %677 = vperm.xlu0 %676, %v627
    %v678 = vpop.permute.xlu0 %677
    %679 = vset.pattern.permute.xlu0 0
    %680 = vperm.xlu0 %679, %v629
    %v681 = vpop.permute.xlu0 %680
    %682 = vset.pattern.permute.xlu0 0
    %683 = vperm.xlu0 %682, %v631
    %v684 = vpop.permute.xlu0 %683
    %685 = vset.pattern.permute.xlu0 0
    %686 = vperm.xlu0 %685, %v633
    %v687 = vpop.permute.xlu0 %686
    %688 = vset.pattern.permute.xlu0 0
    %689 = vperm.xlu0 %688, %v635
    %v690 = vpop.permute.xlu0 %689
    %691 = vset.pattern.permute.xlu0 0
    %692 = vperm.xlu0 %691, %v637
    %v693 = vpop.permute.xlu0 %692
    %694 = vset.pattern.permute.xlu0 0
    %695 = vperm.xlu0 %694, %v639
    %v696 = vpop.permute.xlu0 %695
    %697 = vset.pattern.permute.xlu0 0
    %698 = vperm.xlu0 %697, %v641
    %v699 = vpop.permute.xlu0 %698
    %700 = vset.pattern.permute.xlu0 0
    %701 = vperm.xlu0 %700, %v643
    %v702 = vpop.permute.xlu0 %701
    %703 = vset.pattern.permute.xlu0 0
    %704 = vperm.xlu0 %703, %v645
    %v705 = vpop.permute.xlu0 %704
    %706 = vset.pattern.permute.xlu0 0
    %707 = vperm.xlu0 %706, %v647
    %v708 = vpop.permute.xlu0 %707
    %709 = vset.pattern.permute.xlu0 0
    %710 = vperm.xlu0 %709, %v649
    %v711 = vpop.permute.xlu0 %710
    %712 = vset.pattern.permute.xlu0 0
    %713 = vperm.xlu0 %712, %v651
    %v714 = vpop.permute.xlu0 %713
    %715 = vset.pattern.permute.xlu0 0
    %716 = vperm.xlu0 %715, %v653
    %v717 = vpop.permute.xlu0 %716
    %718 = vset.pattern.permute.xlu0 0
    %719 = vperm.xlu0 %718, %v655
    %v720 = vpop.permute.xlu0 %719
    %721 = vset.pattern.permute.xlu0 0
    %722 = vperm.xlu0 %721, %v657
    %v723 = vpop.permute.xlu0 %722
    %v724 = vlaneseq
    %v725 = vshrl.u32 %v724, 7
    %v726 = vsub.s32 %v468, %v725
    %v727 = vrot.slane %v678, %v726
    %v728 = vlaneseq
    %v729 = vshrl.u32 %v728, 7
    %v730 = vsub.s32 %v473, %v729
    %v731 = vrot.slane %v681, %v730
    %v732 = vsel %vm478, %v731, %v727
    %v733 = vlaneseq
    %v734 = vshrl.u32 %v733, 7
    %v735 = vsub.s32 %v468, %v734
    %v736 = vrot.slane %v684, %v735
    %v737 = vlaneseq
    %v738 = vshrl.u32 %v737, 7
    %v739 = vsub.s32 %v473, %v738
    %v740 = vrot.slane %v687, %v739
    %v741 = vsel %vm478, %v740, %v736
    %v742 = vlaneseq
    %v743 = vshrl.u32 %v742, 7
    %v744 = vsub.s32 %v468, %v743
    %v745 = vrot.slane %v690, %v744
    %v746 = vlaneseq
    %v747 = vshrl.u32 %v746, 7
    %v748 = vsub.s32 %v473, %v747
    %v749 = vrot.slane %v693, %v748
    %v750 = vsel %vm478, %v749, %v745
    %v751 = vlaneseq
    %v752 = vshrl.u32 %v751, 7
    %v753 = vsub.s32 %v468, %v752
    %v754 = vrot.slane %v696, %v753
    %v755 = vlaneseq
    %v756 = vshrl.u32 %v755, 7
    %v757 = vsub.s32 %v473, %v756
    %v758 = vrot.slane %v699, %v757
    %v759 = vsel %vm478, %v758, %v754
    %v760 = vlaneseq
    %v761 = vshrl.u32 %v760, 7
    %v762 = vsub.s32 %v468, %v761
    %v763 = vrot.slane %v702, %v762
    %v764 = vlaneseq
    %v765 = vshrl.u32 %v764, 7
    %v766 = vsub.s32 %v473, %v765
    %v767 = vrot.slane %v705, %v766
    %v768 = vsel %vm478, %v767, %v763
    %v769 = vlaneseq
    %v770 = vshrl.u32 %v769, 7
    %v771 = vsub.s32 %v468, %v770
    %v772 = vrot.slane %v708, %v771
    %v773 = vlaneseq
    %v774 = vshrl.u32 %v773, 7
    %v775 = vsub.s32 %v473, %v774
    %v776 = vrot.slane %v711, %v775
    %v777 = vsel %vm478, %v776, %v772
    %v778 = vlaneseq
    %v779 = vshrl.u32 %v778, 7
    %v780 = vsub.s32 %v468, %v779
    %v781 = vrot.slane %v714, %v780
    %v782 = vlaneseq
    %v783 = vshrl.u32 %v782, 7
    %v784 = vsub.s32 %v473, %v783
    %v785 = vrot.slane %v717, %v784
    %v786 = vsel %vm478, %v785, %v781
    %v787 = vlaneseq
    %v788 = vshrl.u32 %v787, 7
    %v789 = vsub.s32 %v468, %v788
    %v790 = vrot.slane %v720, %v789
    %v791 = vlaneseq
    %v792 = vshrl.u32 %v791, 7
    %v793 = vsub.s32 %v473, %v792
    %v794 = vrot.slane %v723, %v793
    %v795 = vsel %vm478, %v794, %v790
    %v796 = vsel %vm543, %v741, %v732
    %v797 = vsel %vm545, %v750, %v796
    %v798 = vsel %vm547, %v759, %v797
    %v799 = vsel %vm549, %v768, %v798
    %v800 = vsel %vm551, %v777, %v799
    %v801 = vsel %vm553, %v786, %v800
    %v802 = vsel %vm555, %v795, %v801
    %v804 = vsel %vm558, %v802, 0.0
    %805 = vadd.xlane.f32.xlu0 %v804
    %v806 = vpop.xlane.xlu0 %805
    %v807 = vadd.f32 %v659, %v806
    %vm808 = vcmask 7168
    %809 = vst.msk [vmem:[#allocation3] sm:$0xff] %vm808, %v807
    %v810 = vld [vmem:[#allocation4] sm:$0xff]
    %812 = vset.pattern.permute.xlu0 0
    %813 = vperm.xlu0 %812, %v565
    %v814 = vpop.permute.xlu0 %813
    %v816 = vmul.f32 %v814, %v810
    %v833 = vmul.f32 %v678, %v278
    %v834 = vmul.f32 %v681, %v279
    %v835 = vmul.f32 %v684, %v280
    %v836 = vmul.f32 %v687, %v281
    %v837 = vmul.f32 %v690, %v282
    %v838 = vmul.f32 %v693, %v283
    %v839 = vmul.f32 %v696, %v284
    %v840 = vmul.f32 %v699, %v285
    %v841 = vmul.f32 %v702, %v286
    %v842 = vmul.f32 %v705, %v287
    %v843 = vmul.f32 %v708, %v288
    %v844 = vmul.f32 %v711, %v289
    %v845 = vmul.f32 %v714, %v290
    %v846 = vmul.f32 %v717, %v291
    %v847 = vmul.f32 %v720, %v292
    %v848 = vmul.f32 %v723, %v293
    %v849 = vsel %vm401, %v833, 0.0
    %v850 = vsel %vm401, %v834, 0.0
    %v851 = vadd.f32 %v849, %v850
    %v852 = vrot.slane %v851, 4
    %v853 = vadd.f32 %v851, %v852
    %v854 = vrot.slane %v853, 2
    %v855 = vadd.f32 %v853, %v854
    %v856 = vrot.slane %v855, 1
    %v857 = vadd.f32 %v855, %v856
    %v858 = vsel %vm401, %v835, 0.0
    %v859 = vsel %vm401, %v836, 0.0
    %v860 = vadd.f32 %v858, %v859
    %v861 = vrot.slane %v860, 4
    %v862 = vadd.f32 %v860, %v861
    %v863 = vrot.slane %v862, 2
    %v864 = vadd.f32 %v862, %v863
    %v865 = vrot.slane %v864, 1
    %v866 = vadd.f32 %v864, %v865
    %v867 = vsel %vm401, %v837, 0.0
    %v868 = vsel %vm401, %v838, 0.0
    %v869 = vadd.f32 %v867, %v868
    %v870 = vrot.slane %v869, 4
    %v871 = vadd.f32 %v869, %v870
    %v872 = vrot.slane %v871, 2
    %v873 = vadd.f32 %v871, %v872
    %v874 = vrot.slane %v873, 1
    %v875 = vadd.f32 %v873, %v874
    %v876 = vsel %vm401, %v839, 0.0
    %v877 = vsel %vm401, %v840, 0.0
    %v878 = vadd.f32 %v876, %v877
    %v879 = vrot.slane %v878, 4
    %v880 = vadd.f32 %v878, %v879
    %v881 = vrot.slane %v880, 2
    %v882 = vadd.f32 %v880, %v881
    %v883 = vrot.slane %v882, 1
    %v884 = vadd.f32 %v882, %v883
    %v885 = vsel %vm401, %v841, 0.0
    %v886 = vsel %vm401, %v842, 0.0
    %v887 = vadd.f32 %v885, %v886
    %v888 = vrot.slane %v887, 4
    %v889 = vadd.f32 %v887, %v888
    %v890 = vrot.slane %v889, 2
    %v891 = vadd.f32 %v889, %v890
    %v892 = vrot.slane %v891, 1
    %v893 = vadd.f32 %v891, %v892
    %v894 = vsel %vm401, %v843, 0.0
    %v895 = vsel %vm401, %v844, 0.0
    %v896 = vadd.f32 %v894, %v895
    %v897 = vrot.slane %v896, 4
    %v898 = vadd.f32 %v896, %v897
    %v899 = vrot.slane %v898, 2
    %v900 = vadd.f32 %v898, %v899
    %v901 = vrot.slane %v900, 1
    %v902 = vadd.f32 %v900, %v901
    %v903 = vsel %vm401, %v845, 0.0
    %v904 = vsel %vm401, %v846, 0.0
    %v905 = vadd.f32 %v903, %v904
    %v906 = vrot.slane %v905, 4
    %v907 = vadd.f32 %v905, %v906
    %v908 = vrot.slane %v907, 2
    %v909 = vadd.f32 %v907, %v908
    %v910 = vrot.slane %v909, 1
    %v911 = vadd.f32 %v909, %v910
    %v912 = vsel %vm401, %v847, 0.0
    %v913 = vsel %vm401, %v848, 0.0
    %v914 = vadd.f32 %v912, %v913
    %v915 = vrot.slane %v914, 4
    %v916 = vadd.f32 %v914, %v915
    %v917 = vrot.slane %v916, 2
    %v918 = vadd.f32 %v916, %v917
    %v919 = vrot.slane %v918, 1
    %v920 = vadd.f32 %v918, %v919
    %v929 = vsel %vm543, %v866, %v857
    %v930 = vsel %vm545, %v875, %v929
    %v931 = vsel %vm547, %v884, %v930
    %v932 = vsel %vm549, %v893, %v931
    %v933 = vsel %vm551, %v902, %v932
    %v934 = vsel %vm553, %v911, %v933
    %v935 = vsel %vm555, %v920, %v934
    %v937 = vadd.f32 %v816, %v935
    %938 = vst.msk [vmem:[#allocation4] sm:$0xff] %vm401, %v937
    %939 = vst.msk [vmem:[#allocation2] sm:$0xff] %vm808, %v562
    // Predicated region
    $region54: #{tpu_custom_call.1} parent=1 // pred_check
      %p940 = pneg %p91
    $region55: #{tpu_custom_call.1} parent=1 // pred_check_branch
      %942 = sbr.rel (%p940) target = $region57
    $region56: #{tpu_custom_call.1} parent=1 // pred_region
      %v943 = vld [vmem:[#allocation4] sm:$0xff]
      %v944 = vld [vmem:[#allocation3] sm:$0xff]
      %v945 = vrcp.pop %v944
      %947 = vset.pattern.permute.xlu0 0
      %948 = vperm.xlu0 %947, %v945
      %v949 = vpop.permute.xlu0 %948
      %v951 = vmul.f32 %v943, %v949
      %952 = vst.msk [vmem:[#allocation15] sm:$0xff] %vm401, %v951
    $region57: #{tpu_custom_call.1} parent=1 // pred_fallthru
      _
    // Predicated region
    $region58: #{tpu_custom_call.1} parent=1 // pred_check
      _
    $region59: #{tpu_custom_call.1} parent=1 // pred_check_branch
      %954 = sbr.rel (0) target = $region61
    $region60: #{tpu_custom_call.1} parent=1 // pred_region
      %s956 = ssub.s32 128, 128
      %957 = vsyncadd [#allocation8], %s956
      %s959 = sshll.u32 [#allocation15], 4
      %s960 = int_to_ptr.vmem [resolvable:$true] %s959
      %962 = dma.vmem_to_hbm [thread:$0]  %s960, 128, %s7, [#allocation8]
    $region61: #{tpu_custom_call.1} parent=1 // pred_fallthru
      _
    // Predicated region
    $region62: #{tpu_custom_call.1} parent=1 // pred_check
      _
    $region63: #{tpu_custom_call.1} parent=1 // pred_check_branch
      %964 = sbr.rel (0) target = $region65
    $region64: #{tpu_custom_call.1} parent=1 // pred_region
      %965 = dma.done [#allocation8], 128
    $region65: #{tpu_custom_call.1} parent=1 // pred_fallthru
      _
    %966 = vsyncpa [#allocation7], 1
    %967 = vsyncpa [#allocation10], 1
    %968 = vsyncpa [#allocation13], 1
    %969 = vsyncpa [#allocation8], 1

// kernel: tpu_custom_call.1
$region0: #{tpu_custom_call.1}
  #allocation0 [shape = 'u32[]', space=smem, size = 0x4, offset = 0x4, fixed_abs, tag = 'smem constant byte address 0x4 - core index']
  #allocation1 [shape = 'u32[144,128]{1,0:T(1,128)}', space=vmem, size = 0x12000, scoped, tag = 'internal scratch']
  #allocation2 [shape = 'f32[8,1]{1,0:T(8,128)}', space=vmem, size = 0x1000, scoped, tag = 'scratch operand']
  #allocation3 [shape = 'f32[8,1]{1,0:T(8,128)}', space=vmem, size = 0x1000, scoped, tag = 'scratch operand']
  #allocation4 [shape = 'f32[8,32]{1,0:T(8,128)}', space=vmem, size = 0x1000, scoped, tag = 'scratch operand']
  #allocation5 [shape = 'f32[8,32]{1,0:T(8,128)}', space=vmem, size = 0x1000, scoped, tag = 'scratch operand']
  %s0 = inlined_call_operand.hbm [shape: f32[8,32], index: 0, kind: input, shape index: {}]
  %s1 = inlined_call_operand.hbm [shape: f32[8,32], index: 1, kind: input, shape index: {}]
  %s2 = inlined_call_operand.hbm [shape: f32[8,16,32], index: 2, kind: input, shape index: {}]
  %s3 = inlined_call_operand.hbm [shape: f32[32,32], index: 3, kind: input, shape index: {}]
  %s4 = inlined_call_operand.vmem [shape: f32[1,32], index: 4, kind: input, shape index: {}]
  %s5 = inlined_call_operand.hbm [shape: f32[32,64], index: 5, kind: input, shape index: {}]
  %s6 = inlined_call_operand.vmem [shape: f32[1,32], index: 6, kind: input, shape index: {}]
  %s7 = inlined_call_operand.hbm [shape: f32[8,32], index: 7, kind: output, shape index: {}]
  %s8 = sld [smem:[#allocation0]]
  $region66: #{tpu_custom_call.1} parent=0
    _
  %s10 = ssub.s32 1, %s8
  %s11 = scalar_select 0, %s10, %s8
  $region1: #{tpu_custom_call.1} parent=0
    #allocation6 [shape = 'u8[4096]{0}', space=vmem, size = 0x1000, scoped, tag = 'input window, operand 0, single buffered']
    #allocation7 [shape = 's32[1]{0}', space=sflag, size = 0x4, scoped, tag = 'scoped memory for tpu_custom_call.1']
    #allocation8 [shape = 's32[1]{0}', space=sflag, size = 0x4, scoped, tag = 'scoped memory for tpu_custom_call.1']
    #allocation9 [shape = 'u8[4096]{0}', space=vmem, size = 0x1000, scoped, tag = 'input window, operand 1, single buffered']
    #allocation10 [shape = 's32[1]{0}', space=sflag, size = 0x4, scoped, tag = 'scoped memory for tpu_custom_call.1']
    #allocation11 [shape = 'u8[65536]{0}', space=vmem, size = 0x10000, scoped, tag = 'input window, operand 2, single buffered']
    #allocation12 [shape = 'u8[16384]{0}', space=vmem, size = 0x4000, scoped, tag = 'input window, operand 3, single buffered']
    #allocation13 [shape = 's32[1]{0}', space=sflag, size = 0x4, scoped, tag = 'scoped memory for tpu_custom_call.1']
    #allocation14 [shape = 'u8[16384]{0}', space=vmem, size = 0x4000, scoped, tag = 'input window, operand 5, single buffered']
    #allocation15 [shape = 'u8[4096]{0}', space=vmem, size = 0x1000, scoped, tag = 'output window, operand 0, single buffered']
    %12 = vsyncpa [#allocation7], 0
    %13 = vsyncpa [#allocation10], 0
    %14 = vsyncpa [#allocation13], 0
    %15 = vsyncpa [#allocation8], 0
    // Predicated region
    $region2: #{tpu_custom_call.1} parent=1 // pred_check
      _
    $region3: #{tpu_custom_call.1} parent=1 // pred_check_branch
      %17 = sbr.rel (0) target = $region5
    $region4: #{tpu_custom_call.1} parent=1 // pred_region
      %s19 = ssub.s32 128, 128
      %20 = vsyncadd [#allocation7], %s19
      %s22 = sshll.u32 [#allocation6], 4
      %s23 = int_to_ptr.vmem [resolvable:$true] %s22
      %25 = dma.hbm_to_vmem [thread:$0]  %s0, 128, %s23, [#allocation7]
    $region5: #{tpu_custom_call.1} parent=1 // pred_fallthru
      _
    // Predicated region
    $region6: #{tpu_custom_call.1} parent=1 // pred_check
      _
    $region7: #{tpu_custom_call.1} parent=1 // pred_check_branch
      %27 = sbr.rel (0) target = $region9
    $region8: #{tpu_custom_call.1} parent=1 // pred_region
      %s29 = ssub.s32 128, 128
      %30 = vsyncadd [#allocation10], %s29
      %s32 = sshll.u32 [#allocation9], 4
      %s33 = int_to_ptr.vmem [resolvable:$true] %s32
      %35 = dma.hbm_to_vmem [thread:$0]  %s1, 128, %s33, [#allocation10]
    $region9: #{tpu_custom_call.1} parent=1 // pred_fallthru
      _
    // Predicated region
    $region10: #{tpu_custom_call.1} parent=1 // pred_check
      _
    $region11: #{tpu_custom_call.1} parent=1 // pred_check_branch
      %37 = sbr.rel (0) target = $region13
    $region12: #{tpu_custom_call.1} parent=1 // pred_region
      %s39 = ssub.s32 2048, 2048
      %40 = vsyncadd [#allocation10], %s39
      %s41 = sshll.u32 [#allocation11], 4
      %s42 = int_to_ptr.vmem [resolvable:$true] %s41
      %47 = dma.hbm_to_vmem [thread:$0]  %s2, 2048, %s42, [#allocation10], 128, 128, 8
    $region13: #{tpu_custom_call.1} parent=1 // pred_fallthru
      _
    // Predicated region
    $region14: #{tpu_custom_call.1} parent=1 // pred_check
      _
    $region15: #{tpu_custom_call.1} parent=1 // pred_check_branch
      %49 = sbr.rel (0) target = $region17
    $region16: #{tpu_custom_call.1} parent=1 // pred_region
      %s51 = ssub.s32 512, 512
      %52 = vsyncadd [#allocation13], %s51
      %s53 = sshll.u32 [#allocation12], 4
      %s54 = int_to_ptr.vmem [resolvable:$true] %s53
      %59 = dma.hbm_to_vmem [thread:$0]  %s3, 512, %s54, [#allocation13], 128, 128, 8
    $region17: #{tpu_custom_call.1} parent=1 // pred_fallthru
      _
    // Predicated region
    $region18: #{tpu_custom_call.1} parent=1 // pred_check
      _
    $region19: #{tpu_custom_call.1} parent=1 // pred_check_branch
      %61 = sbr.rel (0) target = $region21
    $region20: #{tpu_custom_call.1} parent=1 // pred_region
      _
    $region21: #{tpu_custom_call.1} parent=1 // pred_fallthru
      _
    // Predicated region
    $region22: #{tpu_custom_call.1} parent=1 // pred_check
      _
    $region23: #{tpu_custom_call.1} parent=1 // pred_check_branch
      %63 = sbr.rel (0) target = $region25
    $region24: #{tpu_custom_call.1} parent=1 // pred_region
      %s65 = ssub.s32 512, 512
      %66 = vsyncadd [#allocation13], %s65
      %s67 = sshll.u32 [#allocation14], 4
      %s68 = int_to_ptr.vmem [resolvable:$true] %s67
      %73 = dma.hbm_to_vmem [thread:$0]  %s5, 512, %s68, [#allocation13], 128, 128, 8
    $region25: #{tpu_custom_call.1} parent=1 // pred_fallthru
      _
    // Predicated region
    $region26: #{tpu_custom_call.1} parent=1 // pred_check
      _
    $region27: #{tpu_custom_call.1} parent=1 // pred_check_branch
      %75 = sbr.rel (0) target = $region29
    $region28: #{tpu_custom_call.1} parent=1 // pred_region
      _
    $region29: #{tpu_custom_call.1} parent=1 // pred_fallthru
      _
    // Predicated region
    $region30: #{tpu_custom_call.1} parent=1 // pred_check
      _
    $region31: #{tpu_custom_call.1} parent=1 // pred_check_branch
      %77 = sbr.rel (0) target = $region33
    $region32: #{tpu_custom_call.1} parent=1 // pred_region
      %78 = dma.done [#allocation7], 128
    $region33: #{tpu_custom_call.1} parent=1 // pred_fallthru
      _
    // Predicated region
    $region34: #{tpu_custom_call.1} parent=1 // pred_check
      _
    $region35: #{tpu_custom_call.1} parent=1 // pred_check_branch
      %80 = sbr.rel (0) target = $region37
    $region36: #{tpu_custom_call.1} parent=1 // pred_region
      %81 = dma.done [#allocation10], 128
    $region37: #{tpu_custom_call.1} parent=1 // pred_fallthru
      _
    // Predicated region
    $region38: #{tpu_custom_call.1} parent=1 // pred_check
      _
    $region39: #{tpu_custom_call.1} parent=1 // pred_check_branch
      %83 = sbr.rel (0) target = $region41
    $region40: #{tpu_custom_call.1} parent=1 // pred_region
      %84 = dma.done [#allocation10], 2048
    $region41: #{tpu_custom_call.1} parent=1 // pred_fallthru
      _
    // Predicated region
    $region42: #{tpu_custom_call.1} parent=1 // pred_check
      _
    $region43: #{tpu_custom_call.1} parent=1 // pred_check_branch
      %86 = sbr.rel (0) target = $region45
    $region44: #{tpu_custom_call.1} parent=1 // pred_region
      %87 = dma.done [#allocation13], 512
    $region45: #{tpu_custom_call.1} parent=1 // pred_fallthru
      _
    // Predicated region
    $region46: #{tpu_custom_call.1} parent=1 // pred_check
      _
    $region47: #{tpu_custom_call.1} parent=1 // pred_check_branch
      %89 = sbr.rel (0) target = $region49
    $region48: #{tpu_custom_call.1} parent=1 // pred_region
      %90 = dma.done [#allocation13], 512
    $region49: #{tpu_custom_call.1} parent=1 // pred_fallthru
      _
    %p91 = scmp.eq.s32.totalorder 0, 0
    // Predicated region
    $region50: #{tpu_custom_call.1} parent=1 // pred_check
      %p92 = pneg %p91
    $region51: #{tpu_custom_call.1} parent=1 // pred_check_branch
      %94 = sbr.rel (%p92) target = $region53
    $region52: #{tpu_custom_call.1} parent=1 // pred_region
      %v95 = vld [vmem:[#allocation6] sm:$0xff]
      %v96 = vld [vmem:[#allocation12] sm:$0xff]
      %v97 = vld [vmem:[#allocation12 + $0x8] sm:$0xff]
      %v98 = vld [vmem:[#allocation12 + $0x10] sm:$0xff]
      %v99 = vld [vmem:[#allocation12 + $0x18] sm:$0xff]
      %v100 = vld [vmem:[%s4] sm:$0x1]
      %v102 = vlaneseq
      %v103 = vshrl.u32 %v102, 7
      %v104 = vsub.s32 0, %v103
      %v105 = vrot.slane %v100, %v104
      %vm107 = vcmask 261120
      %v109 = vsel %vm107, %v95, 0
      %111 = vmatprep.subr.mxu0 0.0
      %112 = vmatpush1.msra.mxu0 0.0
      %113 = vmatprep.subr.mxu0 0.0
      %114 = vmatpush1.msra.mxu0 0.0
      %115 = vmatprep.subr.mxu0 0.0
      %116 = vmatpush1.msra.mxu0 0.0
      %117 = vmatprep.subr.mxu0 0.0
      %118 = vmatpush1.msra.mxu0 0.0
      %119 = vmatprep.subr.mxu0 0.0
      %120 = vmatpush1.msra.mxu0 0.0
      %121 = vmatprep.subr.mxu0 0.0
      %122 = vmatpush1.msra.mxu0 0.0
      %123 = vmatprep.subr.mxu0 0.0
      %124 = vmatpush1.msra.mxu0 0.0
      %125 = vmatprep.subr.mxu0 0.0
      %126 = vmatpush1.msra.mxu0 0.0
      %127 = vmatprep.subr.mxu0 0.0
      %128 = vmatpush1.msra.mxu0 0.0
      %129 = vmatprep.subr.mxu0 0.0
      %130 = vmatpush1.msra.mxu0 0.0
      %131 = vmatprep.subr.mxu0 0.0
      %132 = vmatpush1.msra.mxu0 0.0
      %133 = vmatprep.subr.mxu0 0.0
      %134 = vmatpush1.msra.mxu0 0.0
      %135 = vmatprep.subr.mxu0 0.0
      %136 = vmatpush1.msra.mxu0 %v99
      %137 = vmatprep.subr.mxu0 0.0
      %138 = vmatpush1.msra.mxu0 %v98
      %139 = vmatprep.subr.mxu0 0.0
      %140 = vmatpush1.msra.mxu0 %v97
      %141 = vmatprep.subr.mxu0 0.0
      %142 = vmatpush1.msra.mxu0 %v96
      %143 = vmatprep.subr.mxu0 0.0
      %144 = vmatpush2.msra.mxu0 0.0
      %145 = vmatprep.subr.mxu0 0.0
      %146 = vmatpush2.msra.mxu0 0.0
      %147 = vmatprep.subr.mxu0 0.0
      %148 = vmatpush2.msra.mxu0 0.0
      %149 = vmatprep.subr.mxu0 0.0
      %150 = vmatpush2.msra.mxu0 0.0
      %151 = vmatprep.subr.mxu0 0.0
      %152 = vmatpush2.msra.mxu0 0.0
      %153 = vmatprep.subr.mxu0 0.0
      %154 = vmatpush2.msra.mxu0 0.0
      %155 = vmatprep.subr.mxu0 0.0
      %156 = vmatpush2.msra.mxu0 0.0
      %157 = vmatprep.subr.mxu0 0.0
      %158 = vmatpush2.msra.mxu0 0.0
      %159 = vmatprep.subr.mxu0 0.0
      %160 = vmatpush2.msra.mxu0 0.0
      %161 = vmatprep.subr.mxu0 0.0
      %162 = vmatpush2.msra.mxu0 0.0
      %163 = vmatprep.subr.mxu0 0.0
      %164 = vmatpush2.msra.mxu0 0.0
      %165 = vmatprep.subr.mxu0 0.0
      %166 = vmatpush2.msra.mxu0 0.0
      %167 = vmatprep.subr.mxu0 0.0
      %168 = vmatpush2.msra.mxu0 0.0
      %169 = vmatprep.subr.mxu0 0.0
      %170 = vmatpush2.msra.mxu0 0.0
      %171 = vmatprep.subr.mxu0 0.0
      %172 = vmatpush2.msra.mxu0 0.0
      %173 = vmatprep.subr.mxu0 0.0
      %174 = vmatpush2.msra.mxu0 0.0
      %175 = vmatprep.mubr.f32.mxu0 0.0
      %176 = vmatmul.mubr.f32.gmra.mxu0 %v109
      %v177 = vpop.f32.mrf.mxu0
      %v178 = vadd.f32 %v105, %v177
      %v179 = vpop.f32.mrf.mxu0
      %180 = vdwg.mxu0
      %v181 = vld [vmem:[#allocation9] sm:$0xff]
      %v182 = vld [vmem:[%s6] sm:$0x1]
      %v184 = vlaneseq
      %v185 = vshrl.u32 %v184, 7
      %v186 = vsub.s32 0, %v185
      %v187 = vrot.slane %v182, %v186
      %v189 = vmul.f32 %v181, %v187
      %v190 = vld [vmem:[#allocation14] sm:$0xff]
      %v191 = vld [vmem:[#allocation14 + $0x8] sm:$0xff]
      %v192 = vld [vmem:[#allocation14 + $0x10] sm:$0xff]
      %v193 = vld [vmem:[#allocation14 + $0x18] sm:$0xff]
      %v195 = vsel %vm107, %v189, 0
      %197 = vmatprep.subr.mxu0 0.0
      %198 = vmatpush1.msra.mxu0 0.0
      %199 = vmatprep.subr.mxu0 0.0
      %200 = vmatpush1.msra.mxu0 0.0
      %201 = vmatprep.subr.mxu0 0.0
      %202 = vmatpush1.msra.mxu0 0.0
      %203 = vmatprep.subr.mxu0 0.0
      %204 = vmatpush1.msra.mxu0 0.0
      %205 = vmatprep.subr.mxu0 0.0
      %206 = vmatpush1.msra.mxu0 0.0
      %207 = vmatprep.subr.mxu0 0.0
      %208 = vmatpush1.msra.mxu0 0.0
      %209 = vmatprep.subr.mxu0 0.0
      %210 = vmatpush1.msra.mxu0 0.0
      %211 = vmatprep.subr.mxu0 0.0
      %212 = vmatpush1.msra.mxu0 0.0
      %213 = vmatprep.subr.mxu0 0.0
      %214 = vmatpush1.msra.mxu0 0.0
      %215 = vmatprep.subr.mxu0 0.0
      %216 = vmatpush1.msra.mxu0 0.0
      %217 = vmatprep.subr.mxu0 0.0
      %218 = vmatpush1.msra.mxu0 0.0
      %219 = vmatprep.subr.mxu0 0.0
      %220 = vmatpush1.msra.mxu0 0.0
      %221 = vmatprep.subr.mxu0 0.0
      %222 = vmatpush1.msra.mxu0 %v193
      %223 = vmatprep.subr.mxu0 0.0
      %224 = vmatpush1.msra.mxu0 %v192
      %225 = vmatprep.subr.mxu0 0.0
      %226 = vmatpush1.msra.mxu0 %v191
      %227 = vmatprep.subr.mxu0 0.0
      %228 = vmatpush1.msra.mxu0 %v190
      %229 = vmatprep.subr.mxu0 0.0
      %230 = vmatpush2.msra.mxu0 0.0
      %231 = vmatprep.subr.mxu0 0.0
      %232 = vmatpush2.msra.mxu0 0.0
      %233 = vmatprep.subr.mxu0 0.0
      %234 = vmatpush2.msra.mxu0 0.0
      %235 = vmatprep.subr.mxu0 0.0
      %236 = vmatpush2.msra.mxu0 0.0
      %237 = vmatprep.subr.mxu0 0.0
      %238 = vmatpush2.msra.mxu0 0.0
      %239 = vmatprep.subr.mxu0 0.0
      %240 = vmatpush2.msra.mxu0 0.0
      %241 = vmatprep.subr.mxu0 0.0
      %242 = vmatpush2.msra.mxu0 0.0
      %243 = vmatprep.subr.mxu0 0.0
      %244 = vmatpush2.msra.mxu0 0.0
      %245 = vmatprep.subr.mxu0 0.0
      %246 = vmatpush2.msra.mxu0 0.0
      %247 = vmatprep.subr.mxu0 0.0
      %248 = vmatpush2.msra.mxu0 0.0
      %249 = vmatprep.subr.mxu0 0.0
      %250 = vmatpush2.msra.mxu0 0.0
      %251 = vmatprep.subr.mxu0 0.0
      %252 = vmatpush2.msra.mxu0 0.0
      %253 = vmatprep.subr.mxu0 0.0
      %254 = vmatpush2.msra.mxu0 0.0
      %255 = vmatprep.subr.mxu0 0.0
      %256 = vmatpush2.msra.mxu0 0.0
      %257 = vmatprep.subr.mxu0 0.0
      %258 = vmatpush2.msra.mxu0 0.0
      %259 = vmatprep.subr.mxu0 0.0
      %260 = vmatpush2.msra.mxu0 0.0
      %261 = vmatprep.mubr.f32.mxu0 0.0
      %262 = vmatmul.mubr.f32.gmra.mxu0 %v195
      %v263 = vpop.f32.mrf.mxu0
      %v264 = vadd.f32 0.0, %v263
      %v265 = vpop.f32.mrf.mxu0
      %266 = vdwg.mxu0
      %v267 = vmul.f32 %v178, %v264
      %269 = vrot.lane.b32.xlu0 %v264, 96
      %v270 = vpop.permute.xlu0 %269
      %v272 = vadd.f32 %v267, %v270
      %273 = vst.msk [vmem:[#allocation5] sm:$0xff] %vm107, %v272
      %vm274 = vcmask 7168
      %275 = vst.msk [vmem:[#allocation2] sm:$0xff] %vm274, -inf
      %276 = vst.msk [vmem:[#allocation3] sm:$0xff] %vm274, 0.0
      %277 = vst.msk [vmem:[#allocation4] sm:$0xff] %vm107, 0.0
    $region53: #{tpu_custom_call.1} parent=1 // pred_fallthru
      _
    %v278 = vld [vmem:[#allocation11] sm:$0xff]
    %v279 = vld [vmem:[#allocation11 + $0x8] sm:$0xff]
    %v280 = vld [vmem:[#allocation11 + $0x10] sm:$0xff]
    %v281 = vld [vmem:[#allocation11 + $0x18] sm:$0xff]
    %v282 = vld [vmem:[#allocation11 + $0x20] sm:$0xff]
    %v283 = vld [vmem:[#allocation11 + $0x28] sm:$0xff]
    %v284 = vld [vmem:[#allocation11 + $0x30] sm:$0xff]
    %v285 = vld [vmem:[#allocation11 + $0x38] sm:$0xff]
    %v286 = vld [vmem:[#allocation11 + $0x40] sm:$0xff]
    %v287 = vld [vmem:[#allocation11 + $0x48] sm:$0xff]
    %v288 = vld [vmem:[#allocation11 + $0x50] sm:$0xff]
    %v289 = vld [vmem:[#allocation11 + $0x58] sm:$0xff]
    %v290 = vld [vmem:[#allocation11 + $0x60] sm:$0xff]
    %v291 = vld [vmem:[#allocation11 + $0x68] sm:$0xff]
    %v292 = vld [vmem:[#allocation11 + $0x70] sm:$0xff]
    %v293 = vld [vmem:[#allocation11 + $0x78] sm:$0xff]
    %v294 = vld [vmem:[#allocation5] sm:$0xff]
    %v296 = vcombine.high %v294, %v294
    %v298 = vunpack.c.l.s4 1966171168
    %v299 = vunpack.c.0.s8 %v298
    %v300 = vlaneseq
    %v301 = vshrl.u32 %v300, 7
    %v302 = vsub.s32 %v299, %v301
    %v303 = vrot.slane %v294, %v302
    %v305 = vunpack.c.l.s4 1966171168
    %v306 = vunpack.c.0.s8 %v305
    %v307 = vlaneseq
    %v308 = vshrl.u32 %v307, 7
    %v309 = vsub.s32 %v306, %v308
    %v310 = vrot.slane %v296, %v309
    %v311 = vcombine.high %v303, %v303
    %v312 = vcombine.high %v310, %v310
    %v314 = vunpack.c.l.s4 1966171168
    %v315 = vunpack.c.0.s8 %v314
    %v316 = vlaneseq
    %v317 = vshrl.u32 %v316, 7
    %v318 = vsub.s32 %v315, %v317
    %v319 = vrot.slane %v303, %v318
    %v321 = vunpack.c.l.s4 1966171168
    %v322 = vunpack.c.0.s8 %v321
    %v323 = vlaneseq
    %v324 = vshrl.u32 %v323, 7
    %v325 = vsub.s32 %v322, %v324
    %v326 = vrot.slane %v310, %v325
    %v328 = vunpack.c.l.s4 1966171168
    %v329 = vunpack.c.0.s8 %v328
    %v330 = vlaneseq
    %v331 = vshrl.u32 %v330, 7
    %v332 = vsub.s32 %v329, %v331
    %v333 = vrot.slane %v311, %v332
    %v335 = vunpack.c.l.s4 1966171168
    %v336 = vunpack.c.0.s8 %v335
    %v337 = vlaneseq
    %v338 = vshrl.u32 %v337, 7
    %v339 = vsub.s32 %v336, %v338
    %v340 = vrot.slane %v312, %v339
    %v341 = vcombine.high %v319, %v319
    %v342 = vcombine.high %v326, %v326
    %v343 = vcombine.high %v333, %v333
    %v344 = vcombine.high %v340, %v340
    %v345 = vlaneseq
    %v346 = vshrl.u32 %v345, 7
    %v347 = vsub.s32 0, %v346
    %v348 = vrot.slane %v319, %v347
    %v349 = vlaneseq
    %v350 = vshrl.u32 %v349, 7
    %v351 = vsub.s32 0, %v350
    %v352 = vrot.slane %v333, %v351
    %v353 = vlaneseq
    %v354 = vshrl.u32 %v353, 7
    %v355 = vsub.s32 0, %v354
    %v356 = vrot.slane %v341, %v355
    %v357 = vlaneseq
    %v358 = vshrl.u32 %v357, 7
    %v359 = vsub.s32 0, %v358
    %v360 = vrot.slane %v343, %v359
    %v361 = vlaneseq
    %v362 = vshrl.u32 %v361, 7
    %v363 = vsub.s32 0, %v362
    %v364 = vrot.slane %v326, %v363
    %v365 = vlaneseq
    %v366 = vshrl.u32 %v365, 7
    %v367 = vsub.s32 0, %v366
    %v368 = vrot.slane %v340, %v367
    %v369 = vlaneseq
    %v370 = vshrl.u32 %v369, 7
    %v371 = vsub.s32 0, %v370
    %v372 = vrot.slane %v342, %v371
    %v373 = vlaneseq
    %v374 = vshrl.u32 %v373, 7
    %v375 = vsub.s32 0, %v374
    %v376 = vrot.slane %v344, %v375
    %v385 = vmul.f32 %v278, %v348
    %v386 = vmul.f32 %v279, %v348
    %v387 = vmul.f32 %v280, %v352
    %v388 = vmul.f32 %v281, %v352
    %v389 = vmul.f32 %v282, %v356
    %v390 = vmul.f32 %v283, %v356
    %v391 = vmul.f32 %v284, %v360
    %v392 = vmul.f32 %v285, %v360
    %v393 = vmul.f32 %v286, %v364
    %v394 = vmul.f32 %v287, %v364
    %v395 = vmul.f32 %v288, %v368
    %v396 = vmul.f32 %v289, %v368
    %v397 = vmul.f32 %v290, %v372
    %v398 = vmul.f32 %v291, %v372
    %v399 = vmul.f32 %v292, %v376
    %v400 = vmul.f32 %v293, %v376
    %vm401 = vcmask 261120
    %v402 = vsel %vm401, %v385, 0.0
    %403 = vadd.xlane.f32.xlu0 %v402
    %v404 = vpop.xlane.xlu0 %403
    %v405 = vsel %vm401, %v386, 0.0
    %406 = vadd.xlane.f32.xlu0 %v405
    %v407 = vpop.xlane.xlu0 %406
    %v408 = vsel %vm401, %v387, 0.0
    %409 = vadd.xlane.f32.xlu0 %v408
    %v410 = vpop.xlane.xlu0 %409
    %v411 = vsel %vm401, %v388, 0.0
    %412 = vadd.xlane.f32.xlu0 %v411
    %v413 = vpop.xlane.xlu0 %412
    %v414 = vsel %vm401, %v389, 0.0
    %415 = vadd.xlane.f32.xlu0 %v414
    %v416 = vpop.xlane.xlu0 %415
    %v417 = vsel %vm401, %v390, 0.0
    %418 = vadd.xlane.f32.xlu0 %v417
    %v419 = vpop.xlane.xlu0 %418
    %v420 = vsel %vm401, %v391, 0.0
    %421 = vadd.xlane.f32.xlu0 %v420
    %v422 = vpop.xlane.xlu0 %421
    %v423 = vsel %vm401, %v392, 0.0
    %424 = vadd.xlane.f32.xlu0 %v423
    %v425 = vpop.xlane.xlu0 %424
    %v426 = vsel %vm401, %v393, 0.0
    %427 = vadd.xlane.f32.xlu0 %v426
    %v428 = vpop.xlane.xlu0 %427
    %v429 = vsel %vm401, %v394, 0.0
    %430 = vadd.xlane.f32.xlu0 %v429
    %v431 = vpop.xlane.xlu0 %430
    %v432 = vsel %vm401, %v395, 0.0
    %433 = vadd.xlane.f32.xlu0 %v432
    %v434 = vpop.xlane.xlu0 %433
    %v435 = vsel %vm401, %v396, 0.0
    %436 = vadd.xlane.f32.xlu0 %v435
    %v437 = vpop.xlane.xlu0 %436
    %v438 = vsel %vm401, %v397, 0.0
    %439 = vadd.xlane.f32.xlu0 %v438
    %v440 = vpop.xlane.xlu0 %439
    %v441 = vsel %vm401, %v398, 0.0
    %442 = vadd.xlane.f32.xlu0 %v441
    %v443 = vpop.xlane.xlu0 %442
    %v444 = vsel %vm401, %v399, 0.0
    %445 = vadd.xlane.f32.xlu0 %v444
    %v446 = vpop.xlane.xlu0 %445
    %v447 = vsel %vm401, %v400, 0.0
    %448 = vadd.xlane.f32.xlu0 %v447
    %v449 = vpop.xlane.xlu0 %448
    %v450 = vld [vmem:[#allocation2] sm:$0xff]
    %v467 = vlaneseq
    %v468 = vand.u32 %v467, 127
    %v469 = vlaneseq
    %v470 = vshrl.u32 %v469, 7
    %v471 = vsub.s32 %v468, %v470
    %v472 = vrot.slane %v404, %v471
    %v473 = vadd.s32 %v468, 4294967288
    %v474 = vlaneseq
    %v475 = vshrl.u32 %v474, 7
    %v476 = vsub.s32 %v473, %v475
    %v477 = vrot.slane %v407, %v476
    %vm478 = vcmask 130112
    %v479 = vsel %vm478, %v477, %v472
    %v480 = vlaneseq
    %v481 = vshrl.u32 %v480, 7
    %v482 = vsub.s32 %v468, %v481
    %v483 = vrot.slane %v410, %v482
    %v484 = vlaneseq
    %v485 = vshrl.u32 %v484, 7
    %v486 = vsub.s32 %v473, %v485
    %v487 = vrot.slane %v413, %v486
    %v488 = vsel %vm478, %v487, %v483
    %v489 = vlaneseq
    %v490 = vshrl.u32 %v489, 7
    %v491 = vsub.s32 %v468, %v490
    %v492 = vrot.slane %v416, %v491
    %v493 = vlaneseq
    %v494 = vshrl.u32 %v493, 7
    %v495 = vsub.s32 %v473, %v494
    %v496 = vrot.slane %v419, %v495
    %v497 = vsel %vm478, %v496, %v492
    %v498 = vlaneseq
    %v499 = vshrl.u32 %v498, 7
    %v500 = vsub.s32 %v468, %v499
    %v501 = vrot.slane %v422, %v500
    %v502 = vlaneseq
    %v503 = vshrl.u32 %v502, 7
    %v504 = vsub.s32 %v473, %v503
    %v505 = vrot.slane %v425, %v504
    %v506 = vsel %vm478, %v505, %v501
    %v507 = vlaneseq
    %v508 = vshrl.u32 %v507, 7
    %v509 = vsub.s32 %v468, %v508
    %v510 = vrot.slane %v428, %v509
    %v511 = vlaneseq
    %v512 = vshrl.u32 %v511, 7
    %v513 = vsub.s32 %v473, %v512
    %v514 = vrot.slane %v431, %v513
    %v515 = vsel %vm478, %v514, %v510
    %v516 = vlaneseq
    %v517 = vshrl.u32 %v516, 7
    %v518 = vsub.s32 %v468, %v517
    %v519 = vrot.slane %v434, %v518
    %v520 = vlaneseq
    %v521 = vshrl.u32 %v520, 7
    %v522 = vsub.s32 %v473, %v521
    %v523 = vrot.slane %v437, %v522
    %v524 = vsel %vm478, %v523, %v519
    %v525 = vlaneseq
    %v526 = vshrl.u32 %v525, 7
    %v527 = vsub.s32 %v468, %v526
    %v528 = vrot.slane %v440, %v527
    %v529 = vlaneseq
    %v530 = vshrl.u32 %v529, 7
    %v531 = vsub.s32 %v473, %v530
    %v532 = vrot.slane %v443, %v531
    %v533 = vsel %vm478, %v532, %v528
    %v534 = vlaneseq
    %v535 = vshrl.u32 %v534, 7
    %v536 = vsub.s32 %v468, %v535
    %v537 = vrot.slane %v446, %v536
    %v538 = vlaneseq
    %v539 = vshrl.u32 %v538, 7
    %v540 = vsub.s32 %v473, %v539
    %v541 = vrot.slane %v449, %v540
    %v542 = vsel %vm478, %v541, %v537
    %vm543 = vcmask 1041409
    %v544 = vsel %vm543, %v488, %v479
    %vm545 = vcmask 1042434
    %v546 = vsel %vm545, %v497, %v544
    %vm547 = vcmask 1043459
    %v548 = vsel %vm547, %v506, %v546
    %vm549 = vcmask 1044484
    %v550 = vsel %vm549, %v515, %v548
    %vm551 = vcmask 1045509
    %v552 = vsel %vm551, %v524, %v550
    %vm553 = vcmask 1046534
    %v554 = vsel %vm553, %v533, %v552
    %vm555 = vcmask 1047559
    %v556 = vsel %vm555, %v542, %v554
    %vm558 = vcmask 130048
    %v559 = vsel %vm558, %v556, -inf
    %560 = vmax.xlane.f32.xlu0 %v559
    %v561 = vpop.xlane.xlu0 %560
    %v562 = vmax.f32 %v450, %v561
    %v563 = vsub.f32 %v450, %v562
    %v564 = vmul.f32 %v563, 1.442695
    %v565 = vpow.pop %v564
    %567 = vset.pattern.permute.xlu0 0
    %568 = vperm.xlu0 %567, %v562
    %v569 = vpop.permute.xlu0 %568
    %v570 = vlaneseq
    %v571 = vshrl.u32 %v570, 7
    %v572 = vsub.s32 0, %v571
    %v573 = vrot.slane %v569, %v572
    %v574 = vlaneseq
    %v575 = vshrl.u32 %v574, 7
    %v576 = vsub.s32 1, %v575
    %v577 = vrot.slane %v569, %v576
    %v578 = vlaneseq
    %v579 = vshrl.u32 %v578, 7
    %v580 = vsub.s32 2, %v579
    %v581 = vrot.slane %v569, %v580
    %v582 = vlaneseq
    %v583 = vshrl.u32 %v582, 7
    %v584 = vsub.s32 3, %v583
    %v585 = vrot.slane %v569, %v584
    %v586 = vlaneseq
    %v587 = vshrl.u32 %v586, 7
    %v588 = vsub.s32 4, %v587
    %v589 = vrot.slane %v569, %v588
    %v590 = vlaneseq
    %v591 = vshrl.u32 %v590, 7
    %v592 = vsub.s32 5, %v591
    %v593 = vrot.slane %v569, %v592
    %v594 = vlaneseq
    %v595 = vshrl.u32 %v594, 7
    %v596 = vsub.s32 6, %v595
    %v597 = vrot.slane %v569, %v596
    %v598 = vlaneseq
    %v599 = vshrl.u32 %v598, 7
    %v600 = vsub.s32 7, %v599
    %v601 = vrot.slane %v569, %v600
    %v610 = vsub.f32 %v404, %v573
    %v611 = vsub.f32 %v407, %v573
    %v612 = vsub.f32 %v410, %v577
    %v613 = vsub.f32 %v413, %v577
    %v614 = vsub.f32 %v416, %v581
    %v615 = vsub.f32 %v419, %v581
    %v616 = vsub.f32 %v422, %v585
    %v617 = vsub.f32 %v425, %v585
    %v618 = vsub.f32 %v428, %v589
    %v619 = vsub.f32 %v431, %v589
    %v620 = vsub.f32 %v434, %v593
    %v621 = vsub.f32 %v437, %v593
    %v622 = vsub.f32 %v440, %v597
    %v623 = vsub.f32 %v443, %v597
    %v624 = vsub.f32 %v446, %v601
    %v625 = vsub.f32 %v449, %v601
    %v626 = vmul.f32 %v610, 1.442695
    %v627 = vpow.pop %v626
    %v628 = vmul.f32 %v611, 1.442695
    %v629 = vpow.pop %v628
    %v630 = vmul.f32 %v612, 1.442695
    %v631 = vpow.pop %v630
    %v632 = vmul.f32 %v613, 1.442695
    %v633 = vpow.pop %v632
    %v634 = vmul.f32 %v614, 1.442695
    %v635 = vpow.pop %v634
    %v636 = vmul.f32 %v615, 1.442695
    %v637 = vpow.pop %v636
    %v638 = vmul.f32 %v616, 1.442695
    %v639 = vpow.pop %v638
    %v640 = vmul.f32 %v617, 1.442695
    %v641 = vpow.pop %v640
    %v642 = vmul.f32 %v618, 1.442695
    %v643 = vpow.pop %v642
    %v644 = vmul.f32 %v619, 1.442695
    %v645 = vpow.pop %v644
    %v646 = vmul.f32 %v620, 1.442695
    %v647 = vpow.pop %v646
    %v648 = vmul.f32 %v621, 1.442695
    %v649 = vpow.pop %v648
    %v650 = vmul.f32 %v622, 1.442695
    %v651 = vpow.pop %v650
    %v652 = vmul.f32 %v623, 1.442695
    %v653 = vpow.pop %v652
    %v654 = vmul.f32 %v624, 1.442695
    %v655 = vpow.pop %v654
    %v656 = vmul.f32 %v625, 1.442695
    %v657 = vpow.pop %v656
    %v658 = vld [vmem:[#allocation3] sm:$0xff]
    %v659 = vmul.f32 %v565, %v658
    %676 = vset.pattern.permute.xlu0 0
    %677 = vperm.xlu0 %676, %v627
    %v678 = vpop.permute.xlu0 %677
    %679 = vset.pattern.permute.xlu0 0
    %680 = vperm.xlu0 %679, %v629
    %v681 = vpop.permute.xlu0 %680
    %682 = vset.pattern.permute.xlu0 0
    %683 = vperm.xlu0 %682, %v631
    %v684 = vpop.permute.xlu0 %683
    %685 = vset.pattern.permute.xlu0 0
    %686 = vperm.xlu0 %685, %v633
    %v687 = vpop.permute.xlu0 %686
    %688 = vset.pattern.permute.xlu0 0
    %689 = vperm.xlu0 %688, %v635
    %v690 = vpop.permute.xlu0 %689
    %691 = vset.pattern.permute.xlu0 0
    %692 = vperm.xlu0 %691, %v637
    %v693 = vpop.permute.xlu0 %692
    %694 = vset.pattern.permute.xlu0 0
    %695 = vperm.xlu0 %694, %v639
    %v696 = vpop.permute.xlu0 %695
    %697 = vset.pattern.permute.xlu0 0
    %698 = vperm.xlu0 %697, %v641
    %v699 = vpop.permute.xlu0 %698
    %700 = vset.pattern.permute.xlu0 0
    %701 = vperm.xlu0 %700, %v643
    %v702 = vpop.permute.xlu0 %701
    %703 = vset.pattern.permute.xlu0 0
    %704 = vperm.xlu0 %703, %v645
    %v705 = vpop.permute.xlu0 %704
    %706 = vset.pattern.permute.xlu0 0
    %707 = vperm.xlu0 %706, %v647
    %v708 = vpop.permute.xlu0 %707
    %709 = vset.pattern.permute.xlu0 0
    %710 = vperm.xlu0 %709, %v649
    %v711 = vpop.permute.xlu0 %710
    %712 = vset.pattern.permute.xlu0 0
    %713 = vperm.xlu0 %712, %v651
    %v714 = vpop.permute.xlu0 %713
    %715 = vset.pattern.permute.xlu0 0
    %716 = vperm.xlu0 %715, %v653
    %v717 = vpop.permute.xlu0 %716
    %718 = vset.pattern.permute.xlu0 0
    %719 = vperm.xlu0 %718, %v655
    %v720 = vpop.permute.xlu0 %719
    %721 = vset.pattern.permute.xlu0 0
    %722 = vperm.xlu0 %721, %v657
    %v723 = vpop.permute.xlu0 %722
    %v724 = vlaneseq
    %v725 = vshrl.u32 %v724, 7
    %v726 = vsub.s32 %v468, %v725
    %v727 = vrot.slane %v678, %v726
    %v728 = vlaneseq
    %v729 = vshrl.u32 %v728, 7
    %v730 = vsub.s32 %v473, %v729
    %v731 = vrot.slane %v681, %v730
    %v732 = vsel %vm478, %v731, %v727
    %v733 = vlaneseq
    %v734 = vshrl.u32 %v733, 7
    %v735 = vsub.s32 %v468, %v734
    %v736 = vrot.slane %v684, %v735
    %v737 = vlaneseq
    %v738 = vshrl.u32 %v737, 7
    %v739 = vsub.s32 %v473, %v738
    %v740 = vrot.slane %v687, %v739
    %v741 = vsel %vm478, %v740, %v736
    %v742 = vlaneseq
    %v743 = vshrl.u32 %v742, 7
    %v744 = vsub.s32 %v468, %v743
    %v745 = vrot.slane %v690, %v744
    %v746 = vlaneseq
    %v747 = vshrl.u32 %v746, 7
    %v748 = vsub.s32 %v473, %v747
    %v749 = vrot.slane %v693, %v748
    %v750 = vsel %vm478, %v749, %v745
    %v751 = vlaneseq
    %v752 = vshrl.u32 %v751, 7
    %v753 = vsub.s32 %v468, %v752
    %v754 = vrot.slane %v696, %v753
    %v755 = vlaneseq
    %v756 = vshrl.u32 %v755, 7
    %v757 = vsub.s32 %v473, %v756
    %v758 = vrot.slane %v699, %v757
    %v759 = vsel %vm478, %v758, %v754
    %v760 = vlaneseq
    %v761 = vshrl.u32 %v760, 7
    %v762 = vsub.s32 %v468, %v761
    %v763 = vrot.slane %v702, %v762
    %v764 = vlaneseq
    %v765 = vshrl.u32 %v764, 7
    %v766 = vsub.s32 %v473, %v765
    %v767 = vrot.slane %v705, %v766
    %v768 = vsel %vm478, %v767, %v763
    %v769 = vlaneseq
    %v770 = vshrl.u32 %v769, 7
    %v771 = vsub.s32 %v468, %v770
    %v772 = vrot.slane %v708, %v771
    %v773 = vlaneseq
    %v774 = vshrl.u32 %v773, 7
    %v775 = vsub.s32 %v473, %v774
    %v776 = vrot.slane %v711, %v775
    %v777 = vsel %vm478, %v776, %v772
    %v778 = vlaneseq
    %v779 = vshrl.u32 %v778, 7
    %v780 = vsub.s32 %v468, %v779
    %v781 = vrot.slane %v714, %v780
    %v782 = vlaneseq
    %v783 = vshrl.u32 %v782, 7
    %v784 = vsub.s32 %v473, %v783
    %v785 = vrot.slane %v717, %v784
    %v786 = vsel %vm478, %v785, %v781
    %v787 = vlaneseq
    %v788 = vshrl.u32 %v787, 7
    %v789 = vsub.s32 %v468, %v788
    %v790 = vrot.slane %v720, %v789
    %v791 = vlaneseq
    %v792 = vshrl.u32 %v791, 7
    %v793 = vsub.s32 %v473, %v792
    %v794 = vrot.slane %v723, %v793
    %v795 = vsel %vm478, %v794, %v790
    %v796 = vsel %vm543, %v741, %v732
    %v797 = vsel %vm545, %v750, %v796
    %v798 = vsel %vm547, %v759, %v797
    %v799 = vsel %vm549, %v768, %v798
    %v800 = vsel %vm551, %v777, %v799
    %v801 = vsel %vm553, %v786, %v800
    %v802 = vsel %vm555, %v795, %v801
    %v804 = vsel %vm558, %v802, 0.0
    %805 = vadd.xlane.f32.xlu0 %v804
    %v806 = vpop.xlane.xlu0 %805
    %v807 = vadd.f32 %v659, %v806
    %vm808 = vcmask 7168
    %809 = vst.msk [vmem:[#allocation3] sm:$0xff] %vm808, %v807
    %v810 = vld [vmem:[#allocation4] sm:$0xff]
    %812 = vset.pattern.permute.xlu0 0
    %813 = vperm.xlu0 %812, %v565
    %v814 = vpop.permute.xlu0 %813
    %v816 = vmul.f32 %v814, %v810
    %v833 = vmul.f32 %v678, %v278
    %v834 = vmul.f32 %v681, %v279
    %v835 = vmul.f32 %v684, %v280
    %v836 = vmul.f32 %v687, %v281
    %v837 = vmul.f32 %v690, %v282
    %v838 = vmul.f32 %v693, %v283
    %v839 = vmul.f32 %v696, %v284
    %v840 = vmul.f32 %v699, %v285
    %v841 = vmul.f32 %v702, %v286
    %v842 = vmul.f32 %v705, %v287
    %v843 = vmul.f32 %v708, %v288
    %v844 = vmul.f32 %v711, %v289
    %v845 = vmul.f32 %v714, %v290
    %v846 = vmul.f32 %v717, %v291
    %v847 = vmul.f32 %v720, %v292
    %v848 = vmul.f32 %v723, %v293
    %v849 = vsel %vm401, %v833, 0.0
    %v850 = vsel %vm401, %v834, 0.0
    %v851 = vadd.f32 %v849, %v850
    %v852 = vrot.slane %v851, 4
    %v853 = vadd.f32 %v851, %v852
    %v854 = vrot.slane %v853, 2
    %v855 = vadd.f32 %v853, %v854
    %v856 = vrot.slane %v855, 1
    %v857 = vadd.f32 %v855, %v856
    %v858 = vsel %vm401, %v835, 0.0
    %v859 = vsel %vm401, %v836, 0.0
    %v860 = vadd.f32 %v858, %v859
    %v861 = vrot.slane %v860, 4
    %v862 = vadd.f32 %v860, %v861
    %v863 = vrot.slane %v862, 2
    %v864 = vadd.f32 %v862, %v863
    %v865 = vrot.slane %v864, 1
    %v866 = vadd.f32 %v864, %v865
    %v867 = vsel %vm401, %v837, 0.0
    %v868 = vsel %vm401, %v838, 0.0
    %v869 = vadd.f32 %v867, %v868
    %v870 = vrot.slane %v869, 4
    %v871 = vadd.f32 %v869, %v870
    %v872 = vrot.slane %v871, 2
    %v873 = vadd.f32 %v871, %v872
    %v874 = vrot.slane %v873, 1
    %v875 = vadd.f32 %v873, %v874
    %v876 = vsel %vm401, %v839, 0.0
    %v877 = vsel %vm401, %v840, 0.0
    %v878 = vadd.f32 %v876, %v877
    %v879 = vrot.slane %v878, 4
    %v880 = vadd.f32 %v878, %v879
    %v881 = vrot.slane %v880, 2
    %v882 = vadd.f32 %v880, %v881
    %v883 = vrot.slane %v882, 1
    %v884 = vadd.f32 %v882, %v883
    %v885 = vsel %vm401, %v841, 0.0
    %v886 = vsel %vm401, %v842, 0.0
    %v887 = vadd.f32 %v885, %v886
    %v888 = vrot.slane %v887, 4
    %v889 = vadd.f32 %v887, %v888
    %v890 = vrot.slane %v889, 2
    %v891 = vadd.f32 %v889, %v890
    %v892 = vrot.slane %v891, 1
    %v893 = vadd.f32 %v891, %v892
    %v894 = vsel %vm401, %v843, 0.0
    %v895 = vsel %vm401, %v844, 0.0
    %v896 = vadd.f32 %v894, %v895
    %v897 = vrot.slane %v896, 4
    %v898 = vadd.f32 %v896, %v897
    %v899 = vrot.slane %v898, 2
    %v900 = vadd.f32 %v898, %v899
    %v901 = vrot.slane %v900, 1
    %v902 = vadd.f32 %v900, %v901
    %v903 = vsel %vm401, %v845, 0.0
    %v904 = vsel %vm401, %v846, 0.0
    %v905 = vadd.f32 %v903, %v904
    %v906 = vrot.slane %v905, 4
    %v907 = vadd.f32 %v905, %v906
    %v908 = vrot.slane %v907, 2
    %v909 = vadd.f32 %v907, %v908
    %v910 = vrot.slane %v909, 1
    %v911 = vadd.f32 %v909, %v910
    %v912 = vsel %vm401, %v847, 0.0
    %v913 = vsel %vm401, %v848, 0.0
    %v914 = vadd.f32 %v912, %v913
    %v915 = vrot.slane %v914, 4
    %v916 = vadd.f32 %v914, %v915
    %v917 = vrot.slane %v916, 2
    %v918 = vadd.f32 %v916, %v917
    %v919 = vrot.slane %v918, 1
    %v920 = vadd.f32 %v918, %v919
    %v929 = vsel %vm543, %v866, %v857
    %v930 = vsel %vm545, %v875, %v929
    %v931 = vsel %vm547, %v884, %v930
    %v932 = vsel %vm549, %v893, %v931
    %v933 = vsel %vm551, %v902, %v932
    %v934 = vsel %vm553, %v911, %v933
    %v935 = vsel %vm555, %v920, %v934
    %v937 = vadd.f32 %v816, %v935
    %938 = vst.msk [vmem:[#allocation4] sm:$0xff] %vm401, %v937
    %939 = vst.msk [vmem:[#allocation2] sm:$0xff] %vm808, %v562
    // Predicated region
    $region54: #{tpu_custom_call.1} parent=1 // pred_check
      %p940 = pneg %p91
    $region55: #{tpu_custom_call.1} parent=1 // pred_check_branch
      %942 = sbr.rel (%p940) target = $region57
    $region56: #{tpu_custom_call.1} parent=1 // pred_region
      %v943 = vld [vmem:[#allocation4] sm:$0xff]
      %v944 = vld [vmem:[#allocation3] sm:$0xff]
      %v945 = vrcp.pop %v944
      %947 = vset.pattern.permute.xlu0 0
      %948 = vperm.xlu0 %947, %v945
      %v949 = vpop.permute.xlu0 %948
      %v951 = vmul.f32 %v943, %v949
      %952 = vst.msk [vmem:[#allocation15] sm:$0xff] %vm401, %v951
    $region57: #{tpu_custom_call.1} parent=1 // pred_fallthru
      _
    // Predicated region
    $region58: #{tpu_custom_call.1} parent=1 // pred_check
      _
    $region59: #{tpu_custom_call.1} parent=1 // pred_check_branch
      %954 = sbr.rel (0) target = $region61
    $region60: #{tpu_custom_call.1} parent=1 // pred_region
      %s956 = ssub.s32 128, 128
      %957 = vsyncadd [#allocation8], %s956
      %s959 = sshll.u32 [#allocation15], 4
      %s960 = int_to_ptr.vmem [resolvable:$true] %s959
      %962 = dma.vmem_to_hbm [thread:$0]  %s960, 128, %s7, [#allocation8]
    $region61: #{tpu_custom_call.1} parent=1 // pred_fallthru
      _
    // Predicated region
    $region62: #{tpu_custom_call.1} parent=1 // pred_check
      _
    $region63: #{tpu_custom_call.1} parent=1 // pred_check_branch
      %964 = sbr.rel (0) target = $region65
    $region64: #{tpu_custom_call.1} parent=1 // pred_region
      %965 = dma.done [#allocation8], 128
    $region65: #{tpu_custom_call.1} parent=1 // pred_fallthru
      _
    %966 = vsyncpa [#allocation7], 1
    %967 = vsyncpa [#allocation10], 1
    %968 = vsyncpa [#allocation13], 1
    %969 = vsyncpa [#allocation8], 1

</llo_original>
